<compile_context>
chip_gen: v7x
topology: tpu7x:2x2x1
jax: 0.10.0
libtpu: 0.0.40
codegen_flags: <defaults>
</compile_context>

<pallas_src>
import functools
import math

import jax
import jax.numpy as jnp
from jax import lax
from jax.experimental import pallas as pl
from jax.experimental.pallas import tpu as pltpu

LANE = 128
SUBLANE = 8


def _round_up(x, m):
    return (x + m - 1) // m * m


# -----------------------------------------------------------------------------
# Pallas kernels
# -----------------------------------------------------------------------------
def _gru_layer_kernel(x_ref, wih_ref, whh_ref, bgi_ref, bhn_ref, out_ref,
                      gi_sc, h_sc, *, Tc, B, Hp, dirs, unroll):
    """One GRU direction, one time chunk.  grid = (direction, time_chunk).

    x_ref:   (Tc*B, Din) bf16   this chunk of the time-major input (flattened)
    wih_ref: (Din, 3*Hp) bf16   input->hidden weight, [r|z|n] lane slabs
    whh_ref: (Hp, 3*Hp)  bf16   hidden->hidden weight
    bgi_ref: (1, 3*Hp)   f32    fused bias [b_ih_r+b_hh_r | b_ih_z+b_hh_z | b_ih_n]
    bhn_ref: (1, Hp)     f32    b_hh_n (enters the n gate scaled by r)
    out_ref: (Tc, B, Hp) f32    per-step hidden states of this chunk
    gi_sc:   (Tc*B, 3*Hp) f32   hoisted projection scratch (flat, contiguous)
    h_sc:    (B, Hp)      f32   persistent hidden-state carry across chunks
    """
    d = pl.program_id(0)   # direction: 0 = forward, 1 = backward
    c = pl.program_id(1)   # time chunk (backward direction sees chunks reversed)

    @pl.when(c == 0)
    def _init():
        h_sc[...] = jnp.zeros_like(h_sc)

    # Hoisted input->hidden projection for this chunk: ONE MXU matmul
    # (bf16 operands, f32 accumulation), fused bias, single contiguous store.
    gi_sc[...] = (jnp.dot(x_ref[...], wih_ref[...],
                          preferred_element_type=jnp.float32) + bgi_ref[...])

    whh = whh_ref[...]                                    # bf16, stays resident
    bhn = jnp.broadcast_to(bhn_ref[...], (B, Hp))         # hoisted broadcast

    def run_direction(time_of):
        def step(t, h_prev):
            tt = time_of(t)                               # local time index
            off = pl.multiple_of(tt * B, B)               # aligned sublane offset
            gi_t = gi_sc[pl.ds(off, B), :]                # (B, 3Hp) f32
            gh = jnp.dot(h_prev.astype(whh.dtype), whh,
                         preferred_element_type=jnp.float32)   # (B, 3Hp) f32
            r = jax.nn.sigmoid(gi_t[:, 0:Hp] + gh[:, 0:Hp])
            z = jax.nn.sigmoid(gi_t[:, Hp:2 * Hp] + gh[:, Hp:2 * Hp])
            n = jnp.tanh(gi_t[:, 2 * Hp:] + r * (gh[:, 2 * Hp:] + bhn))
            h_new = (1.0 - z) * n + z * h_prev
            out_ref[tt] = h_new
            return h_new

        h_last = lax.fori_loop(0, Tc, step, h_sc[...], unroll=unroll)
        h_sc[...] = h_last                                # carry to next chunk

    @pl.when(d == 0)
    def _fwd():
        run_direction(lambda t: t)                        # local t = 0 .. Tc-1

    if dirs == 2:
        @pl.when(d == 1)
        def _bwd():
            run_direction(lambda t: Tc - 1 - t)           # local t = Tc-1 .. 0


def _heads_kernel(h_ref, w_ref, b_ref, o_ref):
    """Fused q_mu / q_logvar heads: one matmul, lane-dense (padded) output."""
    o_ref[...] = (jnp.dot(h_ref[...], w_ref[...],
                          preferred_element_type=jnp.float32) + b_ref[...])


# -----------------------------------------------------------------------------
# pallas_call wrappers
# -----------------------------------------------------------------------------
def _vmem_limit_bytes(Tc, B, Din, Hp):
    G = 3 * Hp
    est = (2 * Tc * B * Din * 2          # x chunk (bf16), double-buffered
           + 2 * (Din * G + Hp * G) * 2  # weights (bf16), double-buffered
           + 2 * (G + Hp) * 4            # biases
           + Tc * B * G * 4              # gi scratch (f32)
           + 2 * Tc * B * Hp * 4         # out chunk (f32), double-buffered
           + B * Hp * 4)                 # persistent h carry
    # 2x headroom, floor 4 MiB, cap at 64 MiB (v7x physical VMEM per TC).
    return int(min(max(2 * est, 4 << 20), 64 << 20))


def _run_gru_layer(x2d, wih_s, whh_s, bgi_s, bhn_s, *, T, B, Tc):
    """x2d: (T*B, Din) bf16 time-major; weights stacked over directions.

    Returns (T, B, dirs*Hp) f32 per-step hidden states (padded lanes are 0).
    """
    dirs, Din, G = wih_s.shape
    Hp = G // 3
    n_chunks = T // Tc
    unroll = min(Tc, 8)

    def x_map(d, c):
        # forward: chunk c;  backward: chunk n_chunks-1-c (reversed order)
        return (c + d * (n_chunks - 1 - 2 * c), 0)

    def out_map(d, c):
        return (c + d * (n_chunks - 1 - 2 * c), 0, d)

    kernel = functools.partial(_gru_layer_kernel, Tc=Tc, B=B, Hp=Hp,
                               dirs=dirs, unroll=unroll)
    out = pl.pallas_call(
        kernel,
        out_shape=jax.ShapeDtypeStruct((T, B, dirs * Hp), jnp.float32),
        grid=(dirs, n_chunks),
        in_specs=[
            pl.BlockSpec((Tc * B, Din), x_map),
            pl.BlockSpec((None, Din, G), lambda d, c: (d, 0, 0)),
            pl.BlockSpec((None, Hp, G), lambda d, c: (d, 0, 0)),
            pl.BlockSpec((None, 1, G), lambda d, c: (d, 0, 0)),
            pl.BlockSpec((None, 1, Hp), lambda d, c: (d, 0, 0)),
        ],
        out_specs=pl.BlockSpec((Tc, B, Hp), out_map),
        scratch_shapes=[pltpu.VMEM((Tc * B, G), jnp.float32),   # gi projection
                        pltpu.VMEM((B, Hp), jnp.float32)],      # h carry
        compiler_params=pltpu.CompilerParams(
            dimension_semantics=("parallel", "arbitrary"),
            vmem_limit_bytes=_vmem_limit_bytes(Tc, B, Din, Hp)),
    )(x2d, wih_s, whh_s, bgi_s, bhn_s)
    return out


def _run_heads(h, w, b):
    Bh = h.shape[0]
    Zp = w.shape[1]
    vmem = pl.BlockSpec(memory_space=pltpu.MemorySpace.VMEM)
    return pl.pallas_call(
        _heads_kernel,
        out_shape=jax.ShapeDtypeStruct((Bh, Zp), jnp.float32),
        in_specs=[vmem, vmem, vmem],
        out_specs=vmem,
    )(h, w, b)


# -----------------------------------------------------------------------------
# Parameters (PyTorch nn.GRU / nn.Linear layout; GRU weights stored transposed)
# -----------------------------------------------------------------------------
def init_params(key, emb_dim, h_dim, z_dim, biGRU, layers):
    dirs = 2 if biGRU else 1
    k = 1.0 / math.sqrt(h_dim)
    gru = []
    for l in range(layers):
        in_dim = emb_dim if l == 0 else dirs * h_dim
        dir_params = []
        for _ in range(dirs):
            key, k0, k1, k2, k3 = jax.random.split(key, 5)
            wih = jax.random.uniform(k0, (in_dim, 3 * h_dim), jnp.float32, -k, k)
            whh = jax.random.uniform(k1, (h_dim, 3 * h_dim), jnp.float32, -k, k)
            bih = jax.random.uniform(k2, (3 * h_dim,), jnp.float32, -k, k)
            bhh = jax.random.uniform(k3, (3 * h_dim,), jnp.float32, -k, k)
            dir_params.append((wih, whh, bih, bhh))
        gru.append(dir_params)
    kf = 1.0 / math.sqrt(dirs * h_dim)
    key, k0, k1, k2, k3 = jax.random.split(key, 5)
    wmu = jax.random.uniform(k0, (dirs * h_dim, z_dim), jnp.float32, -kf, kf)
    bmu = jax.random.uniform(k1, (1, z_dim), jnp.float32, -kf, kf)
    wlv = jax.random.uniform(k2, (dirs * h_dim, z_dim), jnp.float32, -kf, kf)
    blv = jax.random.uniform(k3, (1, z_dim), jnp.float32, -kf, kf)
    return {"gru": gru, "wmu": wmu, "bmu": bmu, "wlv": wlv, "blv": blv,
            "biGRU": biGRU, "layers": layers, "emb_dim": emb_dim,
            "h_dim": h_dim, "z_dim": z_dim}


# -----------------------------------------------------------------------------
# Lane-dense (Hp = round_up(H, 128)) weight preparation.  Padded positions are
# zero everywhere, so padded hidden lanes stay exactly zero (h_pad = 0.5*h_pad).
# -----------------------------------------------------------------------------
def _pad_gate_cols(w, H, Hp):
    """(..., 3H) -> (..., 3Hp): each of r/z/n goes to its own 128-aligned slab."""
    out = jnp.zeros(w.shape[:-1] + (3 * Hp,), jnp.float32)
    for g in range(3):
        out = out.at[..., g * Hp:g * Hp + H].set(w[..., g * H:(g + 1) * H])
    return out


def _pad_dir_rows(w, dirs, H, Hp):
    """(dirs*H, N) -> (dirs*Hp, N): per-direction row blocks to padded slabs."""
    out = jnp.zeros((dirs * Hp, w.shape[-1]), jnp.float32)
    for dd in range(dirs):
        out = out.at[dd * Hp:dd * Hp + H, :].set(w[dd * H:(dd + 1) * H, :])
    return out


def _prepare_layer(layer_params, layer_idx, dirs, H, Hp):
    wih_l, whh_l, bgi_l, bhn_l = [], [], [], []
    for (wih, whh, bih, bhh) in layer_params:
        wih_p = _pad_gate_cols(wih, H, Hp)                   # (in_dim, 3Hp)
        if layer_idx > 0:                                    # input is dirs*Hp wide
            wih_p = _pad_dir_rows(wih_p, dirs, H, Hp)
        whh_p = jnp.zeros((Hp, 3 * Hp), jnp.float32)
        whh_p = whh_p.at[:H, :].set(_pad_gate_cols(whh, H, Hp))
        fused = bih + jnp.concatenate([bhh[:2 * H], jnp.zeros((H,), jnp.float32)])
        bgi_p = _pad_gate_cols(fused[None, :], H, Hp)        # (1, 3Hp) f32
        bhn_p = jnp.zeros((1, Hp), jnp.float32).at[0, :H].set(bhh[2 * H:])
        wih_l.append(wih_p.astype(jnp.bfloat16))             # MXU operands: bf16
        whh_l.append(whh_p.astype(jnp.bfloat16))
        bgi_l.append(bgi_p)                                  # biases stay f32
        bhn_l.append(bhn_p)
    return (jnp.stack(wih_l), jnp.stack(whh_l),
            jnp.stack(bgi_l), jnp.stack(bhn_l))


def _prepare_head(params, dirs, H, Hp, Z):
    Zp = _round_up(2 * Z, LANE)                              # lane-dense output
    wmu_p = _pad_dir_rows(params["wmu"], dirs, H, Hp)        # (dirs*Hp, Z)
    wlv_p = _pad_dir_rows(params["wlv"], dirs, H, Hp)
    whead = jnp.zeros((dirs * Hp, Zp), jnp.float32)
    whead = whead.at[:, 0:Z].set(wmu_p).at[:, Z:2 * Z].set(wlv_p)
    bhead = jnp.zeros((1, Zp), jnp.float32)
    bhead = bhead.at[:, 0:Z].set(params["bmu"]).at[:, Z:2 * Z].set(params["blv"])
    return whead.astype(jnp.bfloat16), bhead


# -----------------------------------------------------------------------------
# Forward pass
# -----------------------------------------------------------------------------
def gru_encoder_forward(params, x, time_chunk=None):
    """x: (B, T, emb_dim), batch_first, like the PyTorch module."""
    biGRU = params["biGRU"]
    layers = params["layers"]
    H = params["h_dim"]
    Z = params["z_dim"]
    dirs = 2 if biGRU else 1
    Hp = _round_up(H, LANE)

    B, T, E = x.shape
    Bp = _round_up(B, SUBLANE)             # pad batch to full sublanes
    Tc = time_chunk if (time_chunk is not None and T % time_chunk == 0) else T

    xt = jnp.transpose(x, (1, 0, 2)).astype(jnp.float32)     # (T, B, E)
    if Bp != B:
        xt = jnp.pad(xt, ((0, 0), (0, Bp - B), (0, 0)))      # (T, Bp, E)
    x2d = xt.reshape(T * Bp, E).astype(jnp.bfloat16)         # time-major, bf16

    finals = []   # per (layer, direction) final hidden, PyTorch ordering
    for l in range(layers):
        wih_s, whh_s, bgi_s, bhn_s = _prepare_layer(params["gru"][l], l, dirs, H, Hp)
        out = _run_gru_layer(x2d, wih_s, whh_s, bgi_s, bhn_s,
                             T=T, B=Bp, Tc=Tc)               # (T, Bp, dirs*Hp) f32
        finals.append(out[T - 1, :, 0:Hp])                   # forward final hidden
        if dirs == 2:
            finals.append(out[0, :, Hp:2 * Hp])              # backward final hidden
        x2d = out.reshape(T * Bp, dirs * Hp).astype(jnp.bfloat16)
        # TODO(synk): nn.GRU inter-layer dropout (p_dropout) not applied
        # (inference semantics; example uses p_dropout=0.0).

    if biGRU:
        h = jnp.concatenate([finals[-2], finals[-1]], axis=1)    # (Bp, 2*Hp)
    else:
        h = jnp.concatenate(finals, axis=0)                      # (layers*Bp, Hp)

    whead, bhead = _prepare_head(params, dirs, H, Hp, Z)
    z2 = _run_heads(h.astype(jnp.bfloat16), whead, bhead)        # (rows, Zp) f32

    if biGRU:
        return z2[:B, 0:Z], z2[:B, Z:2 * Z]
    z2 = z2.reshape(layers, Bp, -1)[:, :B, :].reshape(layers * B, -1)
    return z2[:, 0:Z], z2[:, Z:2 * Z]


# -----------------------------------------------------------------------------
# Pure-JAX reference (unpadded; matmul operands cast to bf16 like the kernel)
# -----------------------------------------------------------------------------
def _ref_gru_layer(x_tbd, wih, whh, bih, bhh):
    H = whh.shape[0]
    B = x_tbd.shape[1]
    wih_b = wih.astype(jnp.bfloat16)
    whh_b = whh.astype(jnp.bfloat16)

    def step(h, x_t):
        gi = jnp.dot(x_t.astype(jnp.bfloat16), wih_b,
                     preferred_element_type=jnp.float32) + bih
        gh = jnp.dot(h.astype(jnp.bfloat16), whh_b,
                     preferred_element_type=jnp.float32) + bhh
        r = jax.nn.sigmoid(gi[:, :H] + gh[:, :H])
        z = jax.nn.sigmoid(gi[:, H:2 * H] + gh[:, H:2 * H])
        n = jnp.tanh(gi[:, 2 * H:] + r * gh[:, 2 * H:])
        h_new = (1.0 - z) * n + z * h
        return h_new, h_new

    h0 = jnp.zeros((B, H), jnp.float32)
    hT, outs = lax.scan(step, h0, x_tbd)
    return outs, hT


def ref_forward(params, x):
    biGRU = params["biGRU"]
    layers = params["layers"]
    dirs = 2 if biGRU else 1
    inp = jnp.transpose(x, (1, 0, 2)).astype(jnp.float32)
    finals = []
    for l in range(layers):
        outs = []
        for d in range(dirs):
            wih, whh, bih, bhh = params["gru"][l][d]
            xi = inp[::-1] if d == 1 else inp
            out, hT = _ref_gru_layer(xi, wih, whh, bih, bhh)
            if d == 1:
                out = out[::-1]
            outs.append(out)
            finals.append(hT)
        inp = jnp.concatenate(outs, axis=-1) if dirs == 2 else outs[0]
    if biGRU:
        h = jnp.concatenate([finals[-2], finals[-1]], axis=1)
    else:
        h = jnp.concatenate(finals, axis=0)
    hb = h.astype(jnp.bfloat16)
    mu = jnp.dot(hb, params["wmu"].astype(jnp.bfloat16),
                 preferred_element_type=jnp.float32) + params["bmu"]
    lv = jnp.dot(hb, params["wlv"].astype(jnp.bfloat16),
                 preferred_element_type=jnp.float32) + params["blv"]
    return mu, lv


# -----------------------------------------------------------------------------
# Main
# -----------------------------------------------------------------------------
if __name__ == "__main__":
    emb_dim, h_dim, z_dim = 16, 32, 8
    biGRU, layers, p_dropout = True, 2, 0.0
    B, T = 2, 8
    TIME_CHUNK = 4           # exercises the multi-chunk (pipelined) path

    key = jax.random.PRNGKey(0)
    kp, kx = jax.random.split(key)
    params = init_params(kp, emb_dim, h_dim, z_dim, biGRU, layers)
    x = jax.random.normal(kx, (B, T, emb_dim), dtype=jnp.float32)

    # Bidirectional, 2-layer path (the configuration of the example module).
    mu, logvar = gru_encoder_forward(params, x, time_chunk=TIME_CHUNK)
    mu = jax.block_until_ready(mu)
    logvar = jax.block_until_ready(logvar)
    mu_ref, lv_ref = ref_forward(params, x)
    assert mu.shape == (B, z_dim) and logvar.shape == (B, z_dim)
    assert jnp.allclose(mu, mu_ref, atol=5e-3, rtol=5e-3)
    assert jnp.allclose(logvar, lv_ref, atol=5e-3, rtol=5e-3)

    # Also exercise the unidirectional multi-layer path once.
    params_u = init_params(kp, emb_dim, h_dim, z_dim, False, layers)
    mu_u, lv_u = gru_encoder_forward(params_u, x, time_chunk=TIME_CHUNK)
    mu_u = jax.block_until_ready(mu_u)
    mu_ur, lv_ur = ref_forward(params_u, x)
    assert mu_u.shape == (layers * B, z_dim)
    assert jnp.allclose(mu_u, mu_ur, atol=5e-3, rtol=5e-3)
    assert jnp.allclose(lv_u, lv_ur, atol=5e-3, rtol=5e-3)

    print("KERNEL_OK")
</pallas_src>

<mosaic_0001>
module attributes {stable_mosaic.version = 11 : i64} {
  func.func @_gru_layer_kernel(%arg0: i32, %arg1: i32, %arg2: memref<32x16xbf16, #tpu.memory_space<vmem>>, %arg3: memref<1x16x384xbf16, #tpu.memory_space<vmem>>, %arg4: memref<1x128x384xbf16, #tpu.memory_space<vmem>>, %arg5: memref<1x1x384xf32, #tpu.memory_space<vmem>>, %arg6: memref<1x1x128xf32, #tpu.memory_space<vmem>>, %arg7: memref<4x8x128xf32, #tpu.memory_space<vmem>>, %arg8: memref<32x384xf32, #tpu.memory_space<vmem>>, %arg9: memref<8x128xf32, #tpu.memory_space<vmem>>) attributes {dimension_semantics = [#tpu.dimension_semantics<parallel>, #tpu.dimension_semantics<arbitrary>], iteration_bounds = array<i64: 2, 2>, scalar_prefetch = 0 : i64, scratch_operands = 2 : i64, tpu.core_type = #tpu.core_type<tc>, window_params = [{transform_indices = @transform_0, window_bounds = array<i64: 32, 16>}, {transform_indices = @transform_1, window_bounds = array<i64: 1, 16, 384>}, {transform_indices = @transform_2, window_bounds = array<i64: 1, 128, 384>}, {transform_indices = @transform_3, window_bounds = array<i64: 1, 1, 384>}, {transform_indices = @transform_4, window_bounds = array<i64: 1, 1, 128>}, {transform_indices = @transform_5, window_bounds = array<i64: 4, 8, 128>}]} {
    %c0_i32 = arith.constant 0 : i32
    %0 = arith.cmpi eq, %arg1, %c0_i32 : i32
    %1 = arith.extui %0 : i1 to i32
    %c0_i32_0 = arith.constant 0 : i32
    %2 = arith.cmpi ne, %1, %c0_i32_0 : i32
    scf.if %2 {
      %cst_19 = arith.constant 0.000000e+00 : f32
      %24 = vector.broadcast %cst_19 : f32 to vector<8x128xf32>
      %c0_20 = arith.constant 0 : index
      %c0_21 = arith.constant 0 : index
      %25 = vector.load %arg9[%c0_20, %c0_21] : memref<8x128xf32, #tpu.memory_space<vmem>>, vector<8x128xf32>
      tpu.vector_store %arg9[%c0_20, %c0_21], %24 {strides = array<i32>} : memref<8x128xf32, #tpu.memory_space<vmem>>, vector<8x128xf32>,
    } else {
    }
    %c0 = arith.constant 0 : index
    %c0_1 = arith.constant 0 : index
    %3 = vector.load %arg2[%c0, %c0_1] : memref<32x16xbf16, #tpu.memory_space<vmem>>, vector<32x16xbf16>
    %c0_2 = arith.constant 0 : index
    %c0_3 = arith.constant 0 : index
    %c0_4 = arith.constant 0 : index
    %4 = vector.load %arg3[%c0_2, %c0_3, %c0_4] : memref<1x16x384xbf16, #tpu.memory_space<vmem>>, vector<1x16x384xbf16>
    %5 = vector.shape_cast %4 : vector<1x16x384xbf16> to vector<16x384xbf16>
    %cst = arith.constant dense<0.000000e+00> : vector<32x384xf32>
    %6 = tpu.matmul %3, %5, %cst {dimension_numbers = #tpu.dot_dimension_numbers<[1], [0], [0], [1], [0, 0, 1, 1], [], []>} : vector<32x16xbf16>, vector<16x384xbf16>, vector<32x384xf32> -> vector<32x384xf32>
    %c0_5 = arith.constant 0 : index
    %c0_6 = arith.constant 0 : index
    %c0_7 = arith.constant 0 : index
    %7 = vector.load %arg5[%c0_5, %c0_6, %c0_7] : memref<1x1x384xf32, #tpu.memory_space<vmem>>, vector<1x1x384xf32>
    %8 = vector.shape_cast %7 : vector<1x1x384xf32> to vector<1x384xf32>
    %9 = vector.broadcast %8 : vector<1x384xf32> to vector<32x384xf32>
    %10 = arith.addf %6, %9 : vector<32x384xf32>
    %c0_8 = arith.constant 0 : index
    %c0_9 = arith.constant 0 : index
    %11 = vector.load %arg8[%c0_8, %c0_9] : memref<32x384xf32, #tpu.memory_space<vmem>>, vector<32x384xf32>
    tpu.vector_store %arg8[%c0_8, %c0_9], %10 {strides = array<i32>} : memref<32x384xf32, #tpu.memory_space<vmem>>, vector<32x384xf32>,
    %c0_10 = arith.constant 0 : index
    %c0_11 = arith.constant 0 : index
    %c0_12 = arith.constant 0 : index
    %12 = vector.load %arg4[%c0_10, %c0_11, %c0_12] : memref<1x128x384xbf16, #tpu.memory_space<vmem>>, vector<1x128x384xbf16>
    %13 = vector.shape_cast %12 : vector<1x128x384xbf16> to vector<128x384xbf16>
    %c0_13 = arith.constant 0 : index
    %c0_14 = arith.constant 0 : index
    %c0_15 = arith.constant 0 : index
    %14 = vector.load %arg6[%c0_13, %c0_14, %c0_15] : memref<1x1x128xf32, #tpu.memory_space<vmem>>, vector<1x1x128xf32>
    %15 = vector.shape_cast %14 : vector<1x1x128xf32> to vector<1x128xf32>
    %16 = vector.shape_cast %15 : vector<1x128xf32> to vector<1x128xf32>
    %17 = vector.broadcast %16 : vector<1x128xf32> to vector<8x128xf32>
    %c0_i32_16 = arith.constant 0 : i32
    %18 = arith.cmpi eq, %arg0, %c0_i32_16 : i32
    %19 = arith.extui %18 : i1 to i32
    %c0_i32_17 = arith.constant 0 : i32
    %20 = arith.cmpi ne, %19, %c0_i32_17 : i32
    scf.if %20 {
      %c0_19 = arith.constant 0 : index
      %c0_20 = arith.constant 0 : index
      %24 = vector.load %arg9[%c0_19, %c0_20] : memref<8x128xf32, #tpu.memory_space<vmem>>, vector<8x128xf32>
      %c0_i32_21 = arith.constant 0 : i32
      %c8_i32 = arith.constant 8 : i32
      %25 = arith.muli %c0_i32_21, %c8_i32 : i32
      %26 = tpu.assume_multiple %25, 8 : i32
      %27 = arith.index_cast %26 : i32 to index
      %c0_22 = arith.constant 0 : index
      %28 = vector.load %arg8[%27, %c0_22] : memref<32x384xf32, #tpu.memory_space<vmem>>, vector<8x384xf32>
      %29 = arith.truncf %24 : vector<8x128xf32> to vector<8x128xbf16>
      %cst_23 = arith.constant dense<0.000000e+00> : vector<8x384xf32>
      %30 = tpu.matmul %29, %13, %cst_23 {dimension_numbers = #tpu.dot_dimension_numbers<[1], [0], [0], [1], [0, 0, 1, 1], [], []>} : vector<8x128xbf16>, vector<128x384xbf16>, vector<8x384xf32> -> vector<8x384xf32>
      %31 = vector.extract_strided_slice %28 {offsets = [0, 0], sizes = [8, 128], strides = [1, 1]} : vector<8x384xf32> to vector<8x128xf32>
      %32 = vector.extract_strided_slice %30 {offsets = [0, 0], sizes = [8, 128], strides = [1, 1]} : vector<8x384xf32> to vector<8x128xf32>
      %33 = arith.addf %31, %32 : vector<8x128xf32>
      %34 = arith.negf %33 : vector<8x128xf32>
      %35 = math.exp %34 : vector<8x128xf32>
      %cst_24 = arith.constant 1.000000e+00 : f32
      %36 = vector.broadcast %cst_24 : f32 to vector<8x128xf32>
      %37 = arith.addf %36, %35 : vector<8x128xf32>
      %38 = arith.divf %36, %37 : vector<8x128xf32>
      %39 = vector.extract_strided_slice %28 {offsets = [0, 128], sizes = [8, 128], strides = [1, 1]} : vector<8x384xf32> to vector<8x128xf32>
      %40 = vector.extract_strided_slice %30 {offsets = [0, 128], sizes = [8, 128], strides = [1, 1]} : vector<8x384xf32> to vector<8x128xf32>
      %41 = arith.addf %39, %40 : vector<8x128xf32>
      %42 = arith.negf %41 : vector<8x128xf32>
      %43 = math.exp %42 : vector<8x128xf32>
      %cst_25 = arith.constant 1.000000e+00 : f32
      %44 = vector.broadcast %cst_25 : f32 to vector<8x128xf32>
      %45 = arith.addf %44, %43 : vector<8x128xf32>
      %46 = arith.divf %44, %45 : vector<8x128xf32>
      %47 = vector.extract_strided_slice %28 {offsets = [0, 256], sizes = [8, 128], strides = [1, 1]} : vector<8x384xf32> to vector<8x128xf32>
      %48 = vector.extract_strided_slice %30 {offsets = [0, 256], sizes = [8, 128], strides = [1, 1]} : vector<8x384xf32> to vector<8x128xf32>
      %49 = arith.addf %48, %17 : vector<8x128xf32>
      %50 = arith.mulf %38, %49 : vector<8x128xf32>
      %51 = arith.addf %47, %50 : vector<8x128xf32>
      %52 = math.tanh %51 : vector<8x128xf32>
      %cst_26 = arith.constant 1.000000e+00 : f32
      %53 = vector.broadcast %cst_26 : f32 to vector<8x128xf32>
      %54 = arith.subf %53, %46 : vector<8x128xf32>
      %55 = arith.mulf %54, %52 : vector<8x128xf32>
      %56 = arith.mulf %46, %24 : vector<8x128xf32>
      %57 = arith.addf %55, %56 : vector<8x128xf32>
      %58 = arith.index_cast %c0_i32_21 : i32 to index
      %c0_27 = arith.constant 0 : index
      %c0_28 = arith.constant 0 : index
      %59 = vector.load %arg7[%58, %c0_27, %c0_28] : memref<4x8x128xf32, #tpu.memory_space<vmem>>, vector<1x8x128xf32>
      %60 = vector.shape_cast %59 : vector<1x8x128xf32> to vector<8x128xf32>
      %61 = vector.shape_cast %57 : vector<8x128xf32> to vector<1x8x128xf32>
      tpu.vector_store %arg7[%58, %c0_27, %c0_28], %61 {strides = array<i32>} : memref<4x8x128xf32, #tpu.memory_space<vmem>>, vector<1x8x128xf32>,
      %c1_i32_29 = arith.constant 1 : i32
      %c8_i32_30 = arith.constant 8 : i32
      %62 = arith.muli %c1_i32_29, %c8_i32_30 : i32
      %63 = tpu.assume_multiple %62, 8 : i32
      %64 = arith.index_cast %63 : i32 to index
      %c0_31 = arith.constant 0 : index
      %65 = vector.load %arg8[%64, %c0_31] : memref<32x384xf32, #tpu.memory_space<vmem>>, vector<8x384xf32>
      %66 = arith.truncf %57 : vector<8x128xf32> to vector<8x128xbf16>
      %cst_32 = arith.constant dense<0.000000e+00> : vector<8x384xf32>
      %67 = tpu.matmul %66, %13, %cst_32 {dimension_numbers = #tpu.dot_dimension_numbers<[1], [0], [0], [1], [0, 0, 1, 1], [], []>} : vector<8x128xbf16>, vector<128x384xbf16>, vector<8x384xf32> -> vector<8x384xf32>
      %68 = vector.extract_strided_slice %65 {offsets = [0, 0], sizes = [8, 128], strides = [1, 1]} : vector<8x384xf32> to vector<8x128xf32>
      %69 = vector.extract_strided_slice %67 {offsets = [0, 0], sizes = [8, 128], strides = [1, 1]} : vector<8x384xf32> to vector<8x128xf32>
      %70 = arith.addf %68, %69 : vector<8x128xf32>
      %71 = arith.negf %70 : vector<8x128xf32>
      %72 = math.exp %71 : vector<8x128xf32>
      %cst_33 = arith.constant 1.000000e+00 : f32
      %73 = vector.broadcast %cst_33 : f32 to vector<8x128xf32>
      %74 = arith.addf %73, %72 : vector<8x128xf32>
      %75 = arith.divf %73, %74 : vector<8x128xf32>
      %76 = vector.extract_strided_slice %65 {offsets = [0, 128], sizes = [8, 128], strides = [1, 1]} : vector<8x384xf32> to vector<8x128xf32>
      %77 = vector.extract_strided_slice %67 {offsets = [0, 128], sizes = [8, 128], strides = [1, 1]} : vector<8x384xf32> to vector<8x128xf32>
      %78 = arith.addf %76, %77 : vector<8x128xf32>
      %79 = arith.negf %78 : vector<8x128xf32>
      %80 = math.exp %79 : vector<8x128xf32>
      %cst_34 = arith.constant 1.000000e+00 : f32
      %81 = vector.broadcast %cst_34 : f32 to vector<8x128xf32>
      %82 = arith.addf %81, %80 : vector<8x128xf32>
      %83 = arith.divf %81, %82 : vector<8x128xf32>
      %84 = vector.extract_strided_slice %65 {offsets = [0, 256], sizes = [8, 128], strides = [1, 1]} : vector<8x384xf32> to vector<8x128xf32>
      %85 = vector.extract_strided_slice %67 {offsets = [0, 256], sizes = [8, 128], strides = [1, 1]} : vector<8x384xf32> to vector<8x128xf32>
      %86 = arith.addf %85, %17 : vector<8x128xf32>
      %87 = arith.mulf %75, %86 : vector<8x128xf32>
      %88 = arith.addf %84, %87 : vector<8x128xf32>
      %89 = math.tanh %88 : vector<8x128xf32>
      %cst_35 = arith.constant 1.000000e+00 : f32
      %90 = vector.broadcast %cst_35 : f32 to vector<8x128xf32>
      %91 = arith.subf %90, %83 : vector<8x128xf32>
      %92 = arith.mulf %91, %89 : vector<8x128xf32>
      %93 = arith.mulf %83, %57 : vector<8x128xf32>
      %94 = arith.addf %92, %93 : vector<8x128xf32>
      %95 = arith.index_cast %c1_i32_29 : i32 to index
      %c0_36 = arith.constant 0 : index
      %c0_37 = arith.constant 0 : index
      %96 = vector.load %arg7[%95, %c0_36, %c0_37] : memref<4x8x128xf32, #tpu.memory_space<vmem>>, vector<1x8x128xf32>
      %97 = vector.shape_cast %96 : vector<1x8x128xf32> to vector<8x128xf32>
      %98 = vector.shape_cast %94 : vector<8x128xf32> to vector<1x8x128xf32>
      tpu.vector_store %arg7[%95, %c0_36, %c0_37], %98 {strides = array<i32>} : memref<4x8x128xf32, #tpu.memory_space<vmem>>, vector<1x8x128xf32>,
      %c2_i32 = arith.constant 2 : i32
      %c8_i32_38 = arith.constant 8 : i32
      %99 = arith.muli %c2_i32, %c8_i32_38 : i32
      %100 = tpu.assume_multiple %99, 8 : i32
      %101 = arith.index_cast %100 : i32 to index
      %c0_39 = arith.constant 0 : index
      %102 = vector.load %arg8[%101, %c0_39] : memref<32x384xf32, #tpu.memory_space<vmem>>, vector<8x384xf32>
      %103 = arith.truncf %94 : vector<8x128xf32> to vector<8x128xbf16>
      %cst_40 = arith.constant dense<0.000000e+00> : vector<8x384xf32>
      %104 = tpu.matmul %103, %13, %cst_40 {dimension_numbers = #tpu.dot_dimension_numbers<[1], [0], [0], [1], [0, 0, 1, 1], [], []>} : vector<8x128xbf16>, vector<128x384xbf16>, vector<8x384xf32> -> vector<8x384xf32>
      %105 = vector.extract_strided_slice %102 {offsets = [0, 0], sizes = [8, 128], strides = [1, 1]} : vector<8x384xf32> to vector<8x128xf32>
      %106 = vector.extract_strided_slice %104 {offsets = [0, 0], sizes = [8, 128], strides = [1, 1]} : vector<8x384xf32> to vector<8x128xf32>
      %107 = arith.addf %105, %106 : vector<8x128xf32>
      %108 = arith.negf %107 : vector<8x128xf32>
      %109 = math.exp %108 : vector<8x128xf32>
      %cst_41 = arith.constant 1.000000e+00 : f32
      %110 = vector.broadcast %cst_41 : f32 to vector<8x128xf32>
      %111 = arith.addf %110, %109 : vector<8x128xf32>
      %112 = arith.divf %110, %111 : vector<8x128xf32>
      %113 = vector.extract_strided_slice %102 {offsets = [0, 128], sizes = [8, 128], strides = [1, 1]} : vector<8x384xf32> to vector<8x128xf32>
      %114 = vector.extract_strided_slice %104 {offsets = [0, 128], sizes = [8, 128], strides = [1, 1]} : vector<8x384xf32> to vector<8x128xf32>
      %115 = arith.addf %113, %114 : vector<8x128xf32>
      %116 = arith.negf %115 : vector<8x128xf32>
      %117 = math.exp %116 : vector<8x128xf32>
      %cst_42 = arith.constant 1.000000e+00 : f32
      %118 = vector.broadcast %cst_42 : f32 to vector<8x128xf32>
      %119 = arith.addf %118, %117 : vector<8x128xf32>
      %120 = arith.divf %118, %119 : vector<8x128xf32>
      %121 = vector.extract_strided_slice %102 {offsets = [0, 256], sizes = [8, 128], strides = [1, 1]} : vector<8x384xf32> to vector<8x128xf32>
      %122 = vector.extract_strided_slice %104 {offsets = [0, 256], sizes = [8, 128], strides = [1, 1]} : vector<8x384xf32> to vector<8x128xf32>
      %123 = arith.addf %122, %17 : vector<8x128xf32>
      %124 = arith.mulf %112, %123 : vector<8x128xf32>
      %125 = arith.addf %121, %124 : vector<8x128xf32>
      %126 = math.tanh %125 : vector<8x128xf32>
      %cst_43 = arith.constant 1.000000e+00 : f32
      %127 = vector.broadcast %cst_43 : f32 to vector<8x128xf32>
      %128 = arith.subf %127, %120 : vector<8x128xf32>
      %129 = arith.mulf %128, %126 : vector<8x128xf32>
      %130 = arith.mulf %120, %94 : vector<8x128xf32>
      %131 = arith.addf %129, %130 : vector<8x128xf32>
      %132 = arith.index_cast %c2_i32 : i32 to index
      %c0_44 = arith.constant 0 : index
      %c0_45 = arith.constant 0 : index
      %133 = vector.load %arg7[%132, %c0_44, %c0_45] : memref<4x8x128xf32, #tpu.memory_space<vmem>>, vector<1x8x128xf32>
      %134 = vector.shape_cast %133 : vector<1x8x128xf32> to vector<8x128xf32>
      %135 = vector.shape_cast %131 : vector<8x128xf32> to vector<1x8x128xf32>
      tpu.vector_store %arg7[%132, %c0_44, %c0_45], %135 {strides = array<i32>} : memref<4x8x128xf32, #tpu.memory_space<vmem>>, vector<1x8x128xf32>,
      %c3_i32 = arith.constant 3 : i32
      %c8_i32_46 = arith.constant 8 : i32
      %136 = arith.muli %c3_i32, %c8_i32_46 : i32
      %137 = tpu.assume_multiple %136, 8 : i32
      %138 = arith.index_cast %137 : i32 to index
      %c0_47 = arith.constant 0 : index
      %139 = vector.load %arg8[%138, %c0_47] : memref<32x384xf32, #tpu.memory_space<vmem>>, vector<8x384xf32>
      %140 = arith.truncf %131 : vector<8x128xf32> to vector<8x128xbf16>
      %cst_48 = arith.constant dense<0.000000e+00> : vector<8x384xf32>
      %141 = tpu.matmul %140, %13, %cst_48 {dimension_numbers = #tpu.dot_dimension_numbers<[1], [0], [0], [1], [0, 0, 1, 1], [], []>} : vector<8x128xbf16>, vector<128x384xbf16>, vector<8x384xf32> -> vector<8x384xf32>
      %142 = vector.extract_strided_slice %139 {offsets = [0, 0], sizes = [8, 128], strides = [1, 1]} : vector<8x384xf32> to vector<8x128xf32>
      %143 = vector.extract_strided_slice %141 {offsets = [0, 0], sizes = [8, 128], strides = [1, 1]} : vector<8x384xf32> to vector<8x128xf32>
      %144 = arith.addf %142, %143 : vector<8x128xf32>
      %145 = arith.negf %144 : vector<8x128xf32>
      %146 = math.exp %145 : vector<8x128xf32>
      %cst_49 = arith.constant 1.000000e+00 : f32
      %147 = vector.broadcast %cst_49 : f32 to vector<8x128xf32>
      %148 = arith.addf %147, %146 : vector<8x128xf32>
      %149 = arith.divf %147, %148 : vector<8x128xf32>
      %150 = vector.extract_strided_slice %139 {offsets = [0, 128], sizes = [8, 128], strides = [1, 1]} : vector<8x384xf32> to vector<8x128xf32>
      %151 = vector.extract_strided_slice %141 {offsets = [0, 128], sizes = [8, 128], strides = [1, 1]} : vector<8x384xf32> to vector<8x128xf32>
      %152 = arith.addf %150, %151 : vector<8x128xf32>
      %153 = arith.negf %152 : vector<8x128xf32>
      %154 = math.exp %153 : vector<8x128xf32>
      %cst_50 = arith.constant 1.000000e+00 : f32
      %155 = vector.broadcast %cst_50 : f32 to vector<8x128xf32>
      %156 = arith.addf %155, %154 : vector<8x128xf32>
      %157 = arith.divf %155, %156 : vector<8x128xf32>
      %158 = vector.extract_strided_slice %139 {offsets = [0, 256], sizes = [8, 128], strides = [1, 1]} : vector<8x384xf32> to vector<8x128xf32>
      %159 = vector.extract_strided_slice %141 {offsets = [0, 256], sizes = [8, 128], strides = [1, 1]} : vector<8x384xf32> to vector<8x128xf32>
      %160 = arith.addf %159, %17 : vector<8x128xf32>
      %161 = arith.mulf %149, %160 : vector<8x128xf32>
      %162 = arith.addf %158, %161 : vector<8x128xf32>
      %163 = math.tanh %162 : vector<8x128xf32>
      %cst_51 = arith.constant 1.000000e+00 : f32
      %164 = vector.broadcast %cst_51 : f32 to vector<8x128xf32>
      %165 = arith.subf %164, %157 : vector<8x128xf32>
      %166 = arith.mulf %165, %163 : vector<8x128xf32>
      %167 = arith.mulf %157, %131 : vector<8x128xf32>
      %168 = arith.addf %166, %167 : vector<8x128xf32>
      %169 = arith.index_cast %c3_i32 : i32 to index
      %c0_52 = arith.constant 0 : index
      %c0_53 = arith.constant 0 : index
      %170 = vector.load %arg7[%169, %c0_52, %c0_53] : memref<4x8x128xf32, #tpu.memory_space<vmem>>, vector<1x8x128xf32>
      %171 = vector.shape_cast %170 : vector<1x8x128xf32> to vector<8x128xf32>
      %172 = vector.shape_cast %168 : vector<8x128xf32> to vector<1x8x128xf32>
      tpu.vector_store %arg7[%169, %c0_52, %c0_53], %172 {strides = array<i32>} : memref<4x8x128xf32, #tpu.memory_space<vmem>>, vector<1x8x128xf32>,
      %c4_i32 = arith.constant 4 : i32
      %c0_54 = arith.constant 0 : index
      %c0_55 = arith.constant 0 : index
      %173 = vector.load %arg9[%c0_54, %c0_55] : memref<8x128xf32, #tpu.memory_space<vmem>>, vector<8x128xf32>
      tpu.vector_store %arg9[%c0_54, %c0_55], %168 {strides = array<i32>} : memref<8x128xf32, #tpu.memory_space<vmem>>, vector<8x128xf32>,
    } else {
    }
    %c1_i32 = arith.constant 1 : i32
    %21 = arith.cmpi eq, %arg0, %c1_i32 : i32
    %22 = arith.extui %21 : i1 to i32
    %c0_i32_18 = arith.constant 0 : i32
    %23 = arith.cmpi ne, %22, %c0_i32_18 : i32
    scf.if %23 {
      %c0_19 = arith.constant 0 : index
      %c0_20 = arith.constant 0 : index
      %24 = vector.load %arg9[%c0_19, %c0_20] : memref<8x128xf32, #tpu.memory_space<vmem>>, vector<8x128xf32>
      %c0_i32_21 = arith.constant 0 : i32
      %c3_i32 = arith.constant 3 : i32
      %25 = arith.subi %c3_i32, %c0_i32_21 : i32
      %c8_i32 = arith.constant 8 : i32
      %26 = arith.muli %25, %c8_i32 : i32
      %27 = tpu.assume_multiple %26, 8 : i32
      %28 = arith.index_cast %27 : i32 to index
      %c0_22 = arith.constant 0 : index
      %29 = vector.load %arg8[%28, %c0_22] : memref<32x384xf32, #tpu.memory_space<vmem>>, vector<8x384xf32>
      %30 = arith.truncf %24 : vector<8x128xf32> to vector<8x128xbf16>
      %cst_23 = arith.constant dense<0.000000e+00> : vector<8x384xf32>
      %31 = tpu.matmul %30, %13, %cst_23 {dimension_numbers = #tpu.dot_dimension_numbers<[1], [0], [0], [1], [0, 0, 1, 1], [], []>} : vector<8x128xbf16>, vector<128x384xbf16>, vector<8x384xf32> -> vector<8x384xf32>
      %32 = vector.extract_strided_slice %29 {offsets = [0, 0], sizes = [8, 128], strides = [1, 1]} : vector<8x384xf32> to vector<8x128xf32>
      %33 = vector.extract_strided_slice %31 {offsets = [0, 0], sizes = [8, 128], strides = [1, 1]} : vector<8x384xf32> to vector<8x128xf32>
      %34 = arith.addf %32, %33 : vector<8x128xf32>
      %35 = arith.negf %34 : vector<8x128xf32>
      %36 = math.exp %35 : vector<8x128xf32>
      %cst_24 = arith.constant 1.000000e+00 : f32
      %37 = vector.broadcast %cst_24 : f32 to vector<8x128xf32>
      %38 = arith.addf %37, %36 : vector<8x128xf32>
      %39 = arith.divf %37, %38 : vector<8x128xf32>
      %40 = vector.extract_strided_slice %29 {offsets = [0, 128], sizes = [8, 128], strides = [1, 1]} : vector<8x384xf32> to vector<8x128xf32>
      %41 = vector.extract_strided_slice %31 {offsets = [0, 128], sizes = [8, 128], strides = [1, 1]} : vector<8x384xf32> to vector<8x128xf32>
      %42 = arith.addf %40, %41 : vector<8x128xf32>
      %43 = arith.negf %42 : vector<8x128xf32>
      %44 = math.exp %43 : vector<8x128xf32>
      %cst_25 = arith.constant 1.000000e+00 : f32
      %45 = vector.broadcast %cst_25 : f32 to vector<8x128xf32>
      %46 = arith.addf %45, %44 : vector<8x128xf32>
      %47 = arith.divf %45, %46 : vector<8x128xf32>
      %48 = vector.extract_strided_slice %29 {offsets = [0, 256], sizes = [8, 128], strides = [1, 1]} : vector<8x384xf32> to vector<8x128xf32>
      %49 = vector.extract_strided_slice %31 {offsets = [0, 256], sizes = [8, 128], strides = [1, 1]} : vector<8x384xf32> to vector<8x128xf32>
      %50 = arith.addf %49, %17 : vector<8x128xf32>
      %51 = arith.mulf %39, %50 : vector<8x128xf32>
      %52 = arith.addf %48, %51 : vector<8x128xf32>
      %53 = math.tanh %52 : vector<8x128xf32>
      %cst_26 = arith.constant 1.000000e+00 : f32
      %54 = vector.broadcast %cst_26 : f32 to vector<8x128xf32>
      %55 = arith.subf %54, %47 : vector<8x128xf32>
      %56 = arith.mulf %55, %53 : vector<8x128xf32>
      %57 = arith.mulf %47, %24 : vector<8x128xf32>
      %58 = arith.addf %56, %57 : vector<8x128xf32>
      %59 = arith.index_cast %25 : i32 to index
      %c0_27 = arith.constant 0 : index
      %c0_28 = arith.constant 0 : index
      %60 = vector.load %arg7[%59, %c0_27, %c0_28] : memref<4x8x128xf32, #tpu.memory_space<vmem>>, vector<1x8x128xf32>
      %61 = vector.shape_cast %60 : vector<1x8x128xf32> to vector<8x128xf32>
      %62 = vector.shape_cast %58 : vector<8x128xf32> to vector<1x8x128xf32>
      tpu.vector_store %arg7[%59, %c0_27, %c0_28], %62 {strides = array<i32>} : memref<4x8x128xf32, #tpu.memory_space<vmem>>, vector<1x8x128xf32>,
      %c1_i32_29 = arith.constant 1 : i32
      %c3_i32_30 = arith.constant 3 : i32
      %63 = arith.subi %c3_i32_30, %c1_i32_29 : i32
      %c8_i32_31 = arith.constant 8 : i32
      %64 = arith.muli %63, %c8_i32_31 : i32
      %65 = tpu.assume_multiple %64, 8 : i32
      %66 = arith.index_cast %65 : i32 to index
      %c0_32 = arith.constant 0 : index
      %67 = vector.load %arg8[%66, %c0_32] : memref<32x384xf32, #tpu.memory_space<vmem>>, vector<8x384xf32>
      %68 = arith.truncf %58 : vector<8x128xf32> to vector<8x128xbf16>
      %cst_33 = arith.constant dense<0.000000e+00> : vector<8x384xf32>
      %69 = tpu.matmul %68, %13, %cst_33 {dimension_numbers = #tpu.dot_dimension_numbers<[1], [0], [0], [1], [0, 0, 1, 1], [], []>} : vector<8x128xbf16>, vector<128x384xbf16>, vector<8x384xf32> -> vector<8x384xf32>
      %70 = vector.extract_strided_slice %67 {offsets = [0, 0], sizes = [8, 128], strides = [1, 1]} : vector<8x384xf32> to vector<8x128xf32>
      %71 = vector.extract_strided_slice %69 {offsets = [0, 0], sizes = [8, 128], strides = [1, 1]} : vector<8x384xf32> to vector<8x128xf32>
      %72 = arith.addf %70, %71 : vector<8x128xf32>
      %73 = arith.negf %72 : vector<8x128xf32>
      %74 = math.exp %73 : vector<8x128xf32>
      %cst_34 = arith.constant 1.000000e+00 : f32
      %75 = vector.broadcast %cst_34 : f32 to vector<8x128xf32>
      %76 = arith.addf %75, %74 : vector<8x128xf32>
      %77 = arith.divf %75, %76 : vector<8x128xf32>
      %78 = vector.extract_strided_slice %67 {offsets = [0, 128], sizes = [8, 128], strides = [1, 1]} : vector<8x384xf32> to vector<8x128xf32>
      %79 = vector.extract_strided_slice %69 {offsets = [0, 128], sizes = [8, 128], strides = [1, 1]} : vector<8x384xf32> to vector<8x128xf32>
      %80 = arith.addf %78, %79 : vector<8x128xf32>
      %81 = arith.negf %80 : vector<8x128xf32>
      %82 = math.exp %81 : vector<8x128xf32>
      %cst_35 = arith.constant 1.000000e+00 : f32
      %83 = vector.broadcast %cst_35 : f32 to vector<8x128xf32>
      %84 = arith.addf %83, %82 : vector<8x128xf32>
      %85 = arith.divf %83, %84 : vector<8x128xf32>
      %86 = vector.extract_strided_slice %67 {offsets = [0, 256], sizes = [8, 128], strides = [1, 1]} : vector<8x384xf32> to vector<8x128xf32>
      %87 = vector.extract_strided_slice %69 {offsets = [0, 256], sizes = [8, 128], strides = [1, 1]} : vector<8x384xf32> to vector<8x128xf32>
      %88 = arith.addf %87, %17 : vector<8x128xf32>
      %89 = arith.mulf %77, %88 : vector<8x128xf32>
      %90 = arith.addf %86, %89 : vector<8x128xf32>
      %91 = math.tanh %90 : vector<8x128xf32>
      %cst_36 = arith.constant 1.000000e+00 : f32
      %92 = vector.broadcast %cst_36 : f32 to vector<8x128xf32>
      %93 = arith.subf %92, %85 : vector<8x128xf32>
      %94 = arith.mulf %93, %91 : vector<8x128xf32>
      %95 = arith.mulf %85, %58 : vector<8x128xf32>
      %96 = arith.addf %94, %95 : vector<8x128xf32>
      %97 = arith.index_cast %63 : i32 to index
      %c0_37 = arith.constant 0 : index
      %c0_38 = arith.constant 0 : index
      %98 = vector.load %arg7[%97, %c0_37, %c0_38] : memref<4x8x128xf32, #tpu.memory_space<vmem>>, vector<1x8x128xf32>
      %99 = vector.shape_cast %98 : vector<1x8x128xf32> to vector<8x128xf32>
      %100 = vector.shape_cast %96 : vector<8x128xf32> to vector<1x8x128xf32>
      tpu.vector_store %arg7[%97, %c0_37, %c0_38], %100 {strides = array<i32>} : memref<4x8x128xf32, #tpu.memory_space<vmem>>, vector<1x8x128xf32>,
      %c2_i32 = arith.constant 2 : i32
      %c3_i32_39 = arith.constant 3 : i32
      %101 = arith.subi %c3_i32_39, %c2_i32 : i32
      %c8_i32_40 = arith.constant 8 : i32
      %102 = arith.muli %101, %c8_i32_40 : i32
      %103 = tpu.assume_multiple %102, 8 : i32
      %104 = arith.index_cast %103 : i32 to index
      %c0_41 = arith.constant 0 : index
      %105 = vector.load %arg8[%104, %c0_41] : memref<32x384xf32, #tpu.memory_space<vmem>>, vector<8x384xf32>
      %106 = arith.truncf %96 : vector<8x128xf32> to vector<8x128xbf16>
      %cst_42 = arith.constant dense<0.000000e+00> : vector<8x384xf32>
      %107 = tpu.matmul %106, %13, %cst_42 {dimension_numbers = #tpu.dot_dimension_numbers<[1], [0], [0], [1], [0, 0, 1, 1], [], []>} : vector<8x128xbf16>, vector<128x384xbf16>, vector<8x384xf32> -> vector<8x384xf32>
      %108 = vector.extract_strided_slice %105 {offsets = [0, 0], sizes = [8, 128], strides = [1, 1]} : vector<8x384xf32> to vector<8x128xf32>
      %109 = vector.extract_strided_slice %107 {offsets = [0, 0], sizes = [8, 128], strides = [1, 1]} : vector<8x384xf32> to vector<8x128xf32>
      %110 = arith.addf %108, %109 : vector<8x128xf32>
      %111 = arith.negf %110 : vector<8x128xf32>
      %112 = math.exp %111 : vector<8x128xf32>
      %cst_43 = arith.constant 1.000000e+00 : f32
      %113 = vector.broadcast %cst_43 : f32 to vector<8x128xf32>
      %114 = arith.addf %113, %112 : vector<8x128xf32>
      %115 = arith.divf %113, %114 : vector<8x128xf32>
      %116 = vector.extract_strided_slice %105 {offsets = [0, 128], sizes = [8, 128], strides = [1, 1]} : vector<8x384xf32> to vector<8x128xf32>
      %117 = vector.extract_strided_slice %107 {offsets = [0, 128], sizes = [8, 128], strides = [1, 1]} : vector<8x384xf32> to vector<8x128xf32>
      %118 = arith.addf %116, %117 : vector<8x128xf32>
      %119 = arith.negf %118 : vector<8x128xf32>
      %120 = math.exp %119 : vector<8x128xf32>
      %cst_44 = arith.constant 1.000000e+00 : f32
      %121 = vector.broadcast %cst_44 : f32 to vector<8x128xf32>
      %122 = arith.addf %121, %120 : vector<8x128xf32>
      %123 = arith.divf %121, %122 : vector<8x128xf32>
      %124 = vector.extract_strided_slice %105 {offsets = [0, 256], sizes = [8, 128], strides = [1, 1]} : vector<8x384xf32> to vector<8x128xf32>
      %125 = vector.extract_strided_slice %107 {offsets = [0, 256], sizes = [8, 128], strides = [1, 1]} : vector<8x384xf32> to vector<8x128xf32>
      %126 = arith.addf %125, %17 : vector<8x128xf32>
      %127 = arith.mulf %115, %126 : vector<8x128xf32>
      %128 = arith.addf %124, %127 : vector<8x128xf32>
      %129 = math.tanh %128 : vector<8x128xf32>
      %cst_45 = arith.constant 1.000000e+00 : f32
      %130 = vector.broadcast %cst_45 : f32 to vector<8x128xf32>
      %131 = arith.subf %130, %123 : vector<8x128xf32>
      %132 = arith.mulf %131, %129 : vector<8x128xf32>
      %133 = arith.mulf %123, %96 : vector<8x128xf32>
      %134 = arith.addf %132, %133 : vector<8x128xf32>
      %135 = arith.index_cast %101 : i32 to index
      %c0_46 = arith.constant 0 : index
      %c0_47 = arith.constant 0 : index
      %136 = vector.load %arg7[%135, %c0_46, %c0_47] : memref<4x8x128xf32, #tpu.memory_space<vmem>>, vector<1x8x128xf32>
      %137 = vector.shape_cast %136 : vector<1x8x128xf32> to vector<8x128xf32>
      %138 = vector.shape_cast %134 : vector<8x128xf32> to vector<1x8x128xf32>
      tpu.vector_store %arg7[%135, %c0_46, %c0_47], %138 {strides = array<i32>} : memref<4x8x128xf32, #tpu.memory_space<vmem>>, vector<1x8x128xf32>,
      %c3_i32_48 = arith.constant 3 : i32
      %c3_i32_49 = arith.constant 3 : i32
      %139 = arith.subi %c3_i32_49, %c3_i32_48 : i32
      %c8_i32_50 = arith.constant 8 : i32
      %140 = arith.muli %139, %c8_i32_50 : i32
      %141 = tpu.assume_multiple %140, 8 : i32
      %142 = arith.index_cast %141 : i32 to index
      %c0_51 = arith.constant 0 : index
      %143 = vector.load %arg8[%142, %c0_51] : memref<32x384xf32, #tpu.memory_space<vmem>>, vector<8x384xf32>
      %144 = arith.truncf %134 : vector<8x128xf32> to vector<8x128xbf16>
      %cst_52 = arith.constant dense<0.000000e+00> : vector<8x384xf32>
      %145 = tpu.matmul %144, %13, %cst_52 {dimension_numbers = #tpu.dot_dimension_numbers<[1], [0], [0], [1], [0, 0, 1, 1], [], []>} : vector<8x128xbf16>, vector<128x384xbf16>, vector<8x384xf32> -> vector<8x384xf32>
      %146 = vector.extract_strided_slice %143 {offsets = [0, 0], sizes = [8, 128], strides = [1, 1]} : vector<8x384xf32> to vector<8x128xf32>
      %147 = vector.extract_strided_slice %145 {offsets = [0, 0], sizes = [8, 128], strides = [1, 1]} : vector<8x384xf32> to vector<8x128xf32>
      %148 = arith.addf %146, %147 : vector<8x128xf32>
      %149 = arith.negf %148 : vector<8x128xf32>
      %150 = math.exp %149 : vector<8x128xf32>
      %cst_53 = arith.constant 1.000000e+00 : f32
      %151 = vector.broadcast %cst_53 : f32 to vector<8x128xf32>
      %152 = arith.addf %151, %150 : vector<8x128xf32>
      %153 = arith.divf %151, %152 : vector<8x128xf32>
      %154 = vector.extract_strided_slice %143 {offsets = [0, 128], sizes = [8, 128], strides = [1, 1]} : vector<8x384xf32> to vector<8x128xf32>
      %155 = vector.extract_strided_slice %145 {offsets = [0, 128], sizes = [8, 128], strides = [1, 1]} : vector<8x384xf32> to vector<8x128xf32>
      %156 = arith.addf %154, %155 : vector<8x128xf32>
      %157 = arith.negf %156 : vector<8x128xf32>
      %158 = math.exp %157 : vector<8x128xf32>
      %cst_54 = arith.constant 1.000000e+00 : f32
      %159 = vector.broadcast %cst_54 : f32 to vector<8x128xf32>
      %160 = arith.addf %159, %158 : vector<8x128xf32>
      %161 = arith.divf %159, %160 : vector<8x128xf32>
      %162 = vector.extract_strided_slice %143 {offsets = [0, 256], sizes = [8, 128], strides = [1, 1]} : vector<8x384xf32> to vector<8x128xf32>
      %163 = vector.extract_strided_slice %145 {offsets = [0, 256], sizes = [8, 128], strides = [1, 1]} : vector<8x384xf32> to vector<8x128xf32>
      %164 = arith.addf %163, %17 : vector<8x128xf32>
      %165 = arith.mulf %153, %164 : vector<8x128xf32>
      %166 = arith.addf %162, %165 : vector<8x128xf32>
      %167 = math.tanh %166 : vector<8x128xf32>
      %cst_55 = arith.constant 1.000000e+00 : f32
      %168 = vector.broadcast %cst_55 : f32 to vector<8x128xf32>
      %169 = arith.subf %168, %161 : vector<8x128xf32>
      %170 = arith.mulf %169, %167 : vector<8x128xf32>
      %171 = arith.mulf %161, %134 : vector<8x128xf32>
      %172 = arith.addf %170, %171 : vector<8x128xf32>
      %173 = arith.index_cast %139 : i32 to index
      %c0_56 = arith.constant 0 : index
      %c0_57 = arith.constant 0 : index
      %174 = vector.load %arg7[%173, %c0_56, %c0_57] : memref<4x8x128xf32, #tpu.memory_space<vmem>>, vector<1x8x128xf32>
      %175 = vector.shape_cast %174 : vector<1x8x128xf32> to vector<8x128xf32>
      %176 = vector.shape_cast %172 : vector<8x128xf32> to vector<1x8x128xf32>
      tpu.vector_store %arg7[%173, %c0_56, %c0_57], %176 {strides = array<i32>} : memref<4x8x128xf32, #tpu.memory_space<vmem>>, vector<1x8x128xf32>,
      %c4_i32 = arith.constant 4 : i32
      %c0_58 = arith.constant 0 : index
      %c0_59 = arith.constant 0 : index
      %177 = vector.load %arg9[%c0_58, %c0_59] : memref<8x128xf32, #tpu.memory_space<vmem>>, vector<8x128xf32>
      tpu.vector_store %arg9[%c0_58, %c0_59], %172 {strides = array<i32>} : memref<8x128xf32, #tpu.memory_space<vmem>>, vector<8x128xf32>,
    } else {
    }
    return
  }
  func.func @transform_0(%arg0: i32, %arg1: i32) -> (i32, i32) {
    %c2_i32 = arith.constant 2 : i32
    %0 = arith.muli %c2_i32, %arg1 : i32
    %c1_i32 = arith.constant 1 : i32
    %1 = arith.subi %c1_i32, %0 : i32
    %2 = arith.muli %arg0, %1 : i32
    %3 = arith.addi %arg1, %2 : i32
    %c0_i32 = arith.constant 0 : i32
    %c0_i32_0 = arith.constant 0 : i32
    return %3, %c0_i32 : i32, i32
  }
  func.func @transform_1(%arg0: i32, %arg1: i32) -> (i32, i32, i32) {
    %c0_i32 = arith.constant 0 : i32
    %c0_i32_0 = arith.constant 0 : i32
    %c0_i32_1 = arith.constant 0 : i32
    return %arg0, %c0_i32, %c0_i32_0 : i32, i32, i32
  }
  func.func @transform_2(%arg0: i32, %arg1: i32) -> (i32, i32, i32) {
    %c0_i32 = arith.constant 0 : i32
    %c0_i32_0 = arith.constant 0 : i32
    %c0_i32_1 = arith.constant 0 : i32
    return %arg0, %c0_i32, %c0_i32_0 : i32, i32, i32
  }
  func.func @transform_3(%arg0: i32, %arg1: i32) -> (i32, i32, i32) {
    %c0_i32 = arith.constant 0 : i32
    %c0_i32_0 = arith.constant 0 : i32
    %c0_i32_1 = arith.constant 0 : i32
    return %arg0, %c0_i32, %c0_i32_0 : i32, i32, i32
  }
  func.func @transform_4(%arg0: i32, %arg1: i32) -> (i32, i32, i32) {
    %c0_i32 = arith.constant 0 : i32
    %c0_i32_0 = arith.constant 0 : i32
    %c0_i32_1 = arith.constant 0 : i32
    return %arg0, %c0_i32, %c0_i32_0 : i32, i32, i32
  }
  func.func @transform_5(%arg0: i32, %arg1: i32) -> (i32, i32, i32) {
    %c2_i32 = arith.constant 2 : i32
    %0 = arith.muli %c2_i32, %arg1 : i32
    %c1_i32 = arith.constant 1 : i32
    %1 = arith.subi %c1_i32, %0 : i32
    %2 = arith.muli %arg0, %1 : i32
    %3 = arith.addi %arg1, %2 : i32
    %c0_i32 = arith.constant 0 : i32
    %c0_i32_0 = arith.constant 0 : i32
    return %3, %c0_i32, %arg0 : i32, i32, i32
  }
}

</mosaic_0001>

<llo_original>
// kernel: tpu_custom_call.1
$region0: #{tpu_custom_call.1}
  #allocation0 [shape = 'u32[]', space=smem, size = 0x4, offset = 0x4, fixed_abs, tag = 'smem constant byte address 0x4 - core index']
  #allocation1 [shape = 'u32[144,128]{1,0:T(1,128)}', space=vmem, size = 0x12000, scoped, tag = 'internal scratch']
  #allocation2 [shape = 'f32[32,384]{1,0:T(8,128)}', space=vmem, size = 0xc000, scoped, tag = 'scratch operand']
  #allocation3 [shape = 'f32[8,128]{1,0:T(8,128)}', space=vmem, size = 0x1000, scoped, tag = 'scratch operand']
  %s0 = inlined_call_operand.vmem [shape: bf16[64,16], index: 0, kind: input, shape index: {}]
  %s1 = inlined_call_operand.hbm [shape: bf16[2,16,384], index: 1, kind: input, shape index: {}]
  %s2 = inlined_call_operand.hbm [shape: bf16[2,128,384], index: 2, kind: input, shape index: {}]
  %s3 = inlined_call_operand.vmem [shape: f32[2,1,384], index: 3, kind: input, shape index: {}]
  %s4 = inlined_call_operand.vmem [shape: f32[2,1,128], index: 4, kind: input, shape index: {}]
  %s5 = inlined_call_operand.hbm [shape: f32[8,8,256], index: 5, kind: output, shape index: {}]
  %s6 = sld [smem:[#allocation0]]
  $region73: #{tpu_custom_call.1} parent=0
    _
  %s8 = ssub.s32 1, %s6
  %s9 = scalar_select 0, %s8, %s6
  $region1: #{tpu_custom_call.1} parent=0
    #allocation4 [shape = 'u8[24576]{0}', space=vmem, size = 0x6000, scoped, tag = 'input window, operand 1']
    #allocation5 [shape = 's32[2]{0}', space=sflag, size = 0x8, scoped, tag = 'scoped memory for tpu_custom_call.1']
    #allocation6 [shape = 's32[2]{0}', space=sflag, size = 0x8, scoped, tag = 'scoped memory for tpu_custom_call.1']
    #allocation7 [shape = 'u8[196608]{0}', space=vmem, size = 0x30000, scoped, tag = 'input window, operand 2']
    #allocation8 [shape = 's32[2]{0}', space=sflag, size = 0x8, scoped, tag = 'scoped memory for tpu_custom_call.1']
    #allocation9 [shape = 'u8[32768]{0}', space=vmem, size = 0x8000, scoped, tag = 'output window, operand 0']
    %10 = vsyncpa [#allocation5], 0
    %s11 = scalar_lea.sflag [#allocation5], 1
    %12 = vsyncpa %s11, 0
    %13 = vsyncpa [#allocation8], 0
    %s14 = scalar_lea.sflag [#allocation8], 1
    %15 = vsyncpa %s14, 0
    %16 = vsyncpa [#allocation6], 0
    %s17 = scalar_lea.sflag [#allocation6], 1
    %18 = vsyncpa %s17, 0
    loop: start=0, step=1, limit=6
    $region2: #{tpu_custom_call.1} parent=1 // loop_pre_header
      _
    $region3: #{tpu_custom_call.1} parent=1 // loop_header
      %s20 = sphi 0, %s24
      %p21 = scmp.ge.s32.totalorder %s20, 6
      %s27 = sphi 0, %s39
      %s28 = sphi 0, %s35
      %s29 = sphi 0, %s27
      %s30 = sphi 0, %s28
      %s31 = sphi 0, %s29
      %s32 = sphi 0, %s30
      %s50 = sphi 0, %s52
      %s53 = sphi 0, %s50
      %s54 = sphi 0, %s53
      %s70 = sphi 0, %s54
      %s76 = sphi 0, %s78
      %s79 = sphi 0, %s76
      %s80 = sphi 0, %s79
      %s96 = sphi 0, %s80
      %s102 = sphi 0, %s104
      %s105 = sphi 0, %s102
      %s106 = sphi 0, %s105
      %s122 = sphi 0, %s106
      %s128 = sphi 0, %s130
      %s131 = sphi 0, %s128
      %s132 = sphi 0, %s131
      %s148 = sphi 0, %s132
      %s154 = sphi 0, %s156
      %s157 = sphi 0, %s154
      %s158 = sphi 0, %s157
      %s174 = sphi 0, %s158
      %s190 = sphi 0, %s192
      %s193 = sphi 0, %s190
      %s194 = sphi 0, %s193
      %s210 = sphi 0, %s194
    $region4: #{tpu_custom_call.1} parent=1 // loop_header_branch
      %23 = sbr.rel (%p21) target = $region8
    $region5: #{tpu_custom_call.1} parent=1 // loop_body
      %s25 = ssub.s32 %s20, 1
      %s26 = ssub.s32 %s20, 2
      %s33 = sadd.s32 1, %s28
      %p34 = scmp.ge.s32.totalorder %s33, 2
      %s35 = scalar_select %p34, 0, %s33
      %s36 = sadd.s32 1, %s27
      %s37 = scalar_select %p34, %s36, %s27
      %p38 = scmp.ge.s32.totalorder %s37, 2
      %s39 = scalar_select %p38, 0, %s37
      %s40 = smul.u32 %s28, 2
      %s41 = ssub.s32 1, %s40
      %s42 = smul.u32 %s27, %s41
      %s43 = sadd.s32 %s28, %s42
      %s44 = smul.u32 %s35, 2
      %s45 = ssub.s32 1, %s44
      %s46 = smul.u32 %s39, %s45
      %s47 = sadd.s32 %s35, %s46
      %s48 = ssub.s32 %s43, %s47
      %p49 = scmp.eq.s32.totalorder %s48, 0
      %s51 = sadd.s32 %s50, 1
      %s52 = scalar_select %p49, %s50, %s51
      %p55 = pneg %p49
      %p56 = scmp.eq.s32.totalorder %s20, 3
      %p57 = por %p55, %p56
      %p58 = scmp.ne.s32.totalorder %s50, %s53
      %p59 = scmp.eq.s32.totalorder %s20, 0
      %p60 = por %p58, %p59
      %p61 = scmp.ne.s32.totalorder %s50, %s53
      %p62 = scmp.eq.s32.totalorder %s25, 3
      %p63 = por %p61, %p62
      %p64 = scmp.ne.s32.totalorder %s53, %s54
      %p65 = scmp.eq.s32.totalorder %s25, 0
      %p66 = por %p64, %p65
      %p67 = scmp.ne.s32.totalorder %s53, %s54
      %p68 = scmp.eq.s32.totalorder %s26, 3
      %p69 = por %p67, %p68
      %p71 = scmp.ne.s32.totalorder %s54, %s70
      %p72 = scmp.eq.s32.totalorder %s26, 0
      %p73 = por %p71, %p72
      %s74 = ssub.s32 %s27, %s39
      %p75 = scmp.eq.s32.totalorder %s74, 0
      %s77 = sadd.s32 %s76, 1
      %s78 = scalar_select %p75, %s76, %s77
      %p81 = pneg %p75
      %p82 = scmp.eq.s32.totalorder %s20, 3
      %p83 = por %p81, %p82
      %p84 = scmp.ne.s32.totalorder %s76, %s79
      %p85 = scmp.eq.s32.totalorder %s20, 0
      %p86 = por %p84, %p85
      %p87 = scmp.ne.s32.totalorder %s76, %s79
      %p88 = scmp.eq.s32.totalorder %s25, 3
      %p89 = por %p87, %p88
      %p90 = scmp.ne.s32.totalorder %s79, %s80
      %p91 = scmp.eq.s32.totalorder %s25, 0
      %p92 = por %p90, %p91
      %p93 = scmp.ne.s32.totalorder %s79, %s80
      %p94 = scmp.eq.s32.totalorder %s26, 3
      %p95 = por %p93, %p94
      %p97 = scmp.ne.s32.totalorder %s80, %s96
      %p98 = scmp.eq.s32.totalorder %s26, 0
      %p99 = por %p97, %p98
      %s100 = ssub.s32 %s27, %s39
      %p101 = scmp.eq.s32.totalorder %s100, 0
      %s103 = sadd.s32 %s102, 1
      %s104 = scalar_select %p101, %s102, %s103
      %p107 = pneg %p101
      %p108 = scmp.eq.s32.totalorder %s20, 3
      %p109 = por %p107, %p108
      %p110 = scmp.ne.s32.totalorder %s102, %s105
      %p111 = scmp.eq.s32.totalorder %s20, 0
      %p112 = por %p110, %p111
      %p113 = scmp.ne.s32.totalorder %s102, %s105
      %p114 = scmp.eq.s32.totalorder %s25, 3
      %p115 = por %p113, %p114
      %p116 = scmp.ne.s32.totalorder %s105, %s106
      %p117 = scmp.eq.s32.totalorder %s25, 0
      %p118 = por %p116, %p117
      %p119 = scmp.ne.s32.totalorder %s105, %s106
      %p120 = scmp.eq.s32.totalorder %s26, 3
      %p121 = por %p119, %p120
      %p123 = scmp.ne.s32.totalorder %s106, %s122
      %p124 = scmp.eq.s32.totalorder %s26, 0
      %p125 = por %p123, %p124
      %s126 = ssub.s32 %s27, %s39
      %p127 = scmp.eq.s32.totalorder %s126, 0
      %s129 = sadd.s32 %s128, 1
      %s130 = scalar_select %p127, %s128, %s129
      %p133 = pneg %p127
      %p134 = scmp.eq.s32.totalorder %s20, 3
      %p135 = por %p133, %p134
      %p136 = scmp.ne.s32.totalorder %s128, %s131
      %p137 = scmp.eq.s32.totalorder %s20, 0
      %p138 = por %p136, %p137
      %p139 = scmp.ne.s32.totalorder %s128, %s131
      %p140 = scmp.eq.s32.totalorder %s25, 3
      %p141 = por %p139, %p140
      %p142 = scmp.ne.s32.totalorder %s131, %s132
      %p143 = scmp.eq.s32.totalorder %s25, 0
      %p144 = por %p142, %p143
      %p145 = scmp.ne.s32.totalorder %s131, %s132
      %p146 = scmp.eq.s32.totalorder %s26, 3
      %p147 = por %p145, %p146
      %p149 = scmp.ne.s32.totalorder %s132, %s148
      %p150 = scmp.eq.s32.totalorder %s26, 0
      %p151 = por %p149, %p150
      %s152 = ssub.s32 %s27, %s39
      %p153 = scmp.eq.s32.totalorder %s152, 0
      %s155 = sadd.s32 %s154, 1
      %s156 = scalar_select %p153, %s154, %s155
      %p159 = pneg %p153
      %p160 = scmp.eq.s32.totalorder %s20, 3
      %p161 = por %p159, %p160
      %p162 = scmp.ne.s32.totalorder %s154, %s157
      %p163 = scmp.eq.s32.totalorder %s20, 0
      %p164 = por %p162, %p163
      %p165 = scmp.ne.s32.totalorder %s154, %s157
      %p166 = scmp.eq.s32.totalorder %s25, 3
      %p167 = por %p165, %p166
      %p168 = scmp.ne.s32.totalorder %s157, %s158
      %p169 = scmp.eq.s32.totalorder %s25, 0
      %p170 = por %p168, %p169
      %p171 = scmp.ne.s32.totalorder %s157, %s158
      %p172 = scmp.eq.s32.totalorder %s26, 3
      %p173 = por %p171, %p172
      %p175 = scmp.ne.s32.totalorder %s158, %s174
      %p176 = scmp.eq.s32.totalorder %s26, 0
      %p177 = por %p175, %p176
      %s178 = smul.u32 %s28, 2
      %s179 = ssub.s32 1, %s178
      %s180 = smul.u32 %s27, %s179
      %s181 = sadd.s32 %s28, %s180
      %s182 = smul.u32 %s35, 2
      %s183 = ssub.s32 1, %s182
      %s184 = smul.u32 %s39, %s183
      %s185 = sadd.s32 %s35, %s184
      %s186 = ssub.s32 %s181, %s185
      %s187 = ssub.s32 %s27, %s39
      %s188 = sor.u32 %s186, %s187
      %p189 = scmp.eq.s32.totalorder %s188, 0
      %s191 = sadd.s32 %s190, 1
      %s192 = scalar_select %p189, %s190, %s191
      %p195 = pneg %p189
      %p196 = scmp.eq.s32.totalorder %s20, 3
      %p197 = por %p195, %p196
      %p198 = scmp.ne.s32.totalorder %s190, %s193
      %p199 = scmp.eq.s32.totalorder %s20, 0
      %p200 = por %p198, %p199
      %p201 = scmp.ne.s32.totalorder %s190, %s193
      %p202 = scmp.eq.s32.totalorder %s25, 3
      %p203 = por %p201, %p202
      %p204 = scmp.ne.s32.totalorder %s193, %s194
      %p205 = scmp.eq.s32.totalorder %s25, 0
      %p206 = por %p204, %p205
      %p207 = scmp.ne.s32.totalorder %s193, %s194
      %p208 = scmp.eq.s32.totalorder %s26, 3
      %p209 = por %p207, %p208
      %p211 = scmp.ne.s32.totalorder %s194, %s210
      %p212 = scmp.eq.s32.totalorder %s26, 0
      %p213 = por %p211, %p212
      %p214 = scmp.le.s32.totalorder 1, %s20
      %p215 = scmp.lt.s32.totalorder %s20, 5
      %p216 = pnand %p214, %p215
      %p217 = pneg %p216
      // Predicated region
      $region9: #{tpu_custom_call.1} parent=5 // pred_check
        _
      $region10: #{tpu_custom_call.1} parent=5 // pred_check_branch
        %219 = sbr.rel (%p216) target = $region12
      $region11: #{tpu_custom_call.1} parent=5 // pred_region
        %s220 = ssub.s32 %s20, 1
      $region12: #{tpu_custom_call.1} parent=5 // pred_fallthru
        _
      %p221 = scmp.lt.s32.totalorder %s20, 4
      // Predicated region
      $region13: #{tpu_custom_call.1} parent=5 // pred_check
        %p222 = pneg %p221
      $region14: #{tpu_custom_call.1} parent=5 // pred_check_branch
        %224 = sbr.rel (%p222) target = $region16
      $region15: #{tpu_custom_call.1} parent=5 // pred_region
        // Predicated region
        $region17: #{tpu_custom_call.1} parent=15 // pred_check
          %p225 = pneg %p60
        $region18: #{tpu_custom_call.1} parent=15 // pred_check_branch
          %227 = sbr.rel (%p225) target = $region20
        $region19: #{tpu_custom_call.1} parent=15 // pred_region
          %s228 = smul.u32 %s28, 2
          %s229 = ssub.s32 1, %s228
          %s230 = smul.u32 %s27, %s229
          %s231 = sadd.s32 %s28, %s230
          %s232 = smul.u32 4, %s231
          %p233 = scmp.lt.s32.totalorder %s232, 7
          %s234 = scalar_select %p233, %s232, 7
          %s235 = smul.addr %s234, 4
          %s236 = scalar_lea.vmem %s0, %s235
          %s237 = smul.u32 %s28, 2
          %s238 = ssub.s32 1, %s237
          %s239 = smul.u32 %s27, %s238
          %s240 = sadd.s32 %s28, %s239
          %s241 = smul.u32 4, %s240
        $region20: #{tpu_custom_call.1} parent=15 // pred_fallthru
          _
        // Predicated region
        $region21: #{tpu_custom_call.1} parent=15 // pred_check
          %p242 = pneg %p86
        $region22: #{tpu_custom_call.1} parent=15 // pred_check_branch
          %244 = sbr.rel (%p242) target = $region24
        $region23: #{tpu_custom_call.1} parent=15 // pred_region
          %s245 = sand.u32 %s76, 1
          %s246 = scalar_lea.sflag [#allocation5], %s245
          %s247 = sand.u32 %s76, 1
          %s248 = smul.addr %s247, 24
          %s249 = scalar_lea.vmem [#allocation4], %s248
          %s251 = ssub.s32 384, 384
          %252 = vsyncadd %s246, %s251
          %s253 = smul.addr %s27, 6
          %s254 = smul.addr %s253, 64
          %s255 = scalar_lea.hbm %s1, %s254
          %s256 = sshll.u32 %s249, 4
          %s257 = int_to_ptr.vmem [resolvable:$true] %s256
          %262 = dma.hbm_to_vmem [thread:$0]  %s255, 384, %s257, %s246, 192, 192, 12
        $region24: #{tpu_custom_call.1} parent=15 // pred_fallthru
          _
        // Predicated region
        $region25: #{tpu_custom_call.1} parent=15 // pred_check
          %p263 = pneg %p112
        $region26: #{tpu_custom_call.1} parent=15 // pred_check_branch
          %265 = sbr.rel (%p263) target = $region28
        $region27: #{tpu_custom_call.1} parent=15 // pred_region
          %s266 = sand.u32 %s102, 1
          %s267 = scalar_lea.sflag [#allocation8], %s266
          %s268 = sand.u32 %s102, 1
          %s269 = smul.addr %s268, 192
          %s270 = scalar_lea.vmem [#allocation7], %s269
          %s272 = ssub.s32 3072, 3072
          %273 = vsyncadd %s267, %s272
          %s274 = smul.addr %s27, 48
          %s275 = smul.addr %s274, 64
          %s276 = scalar_lea.hbm %s2, %s275
          %s277 = sshll.u32 %s270, 4
          %s278 = int_to_ptr.vmem [resolvable:$true] %s277
          %283 = dma.hbm_to_vmem [thread:$0]  %s276, 3072, %s278, %s267, 192, 192, 12
        $region28: #{tpu_custom_call.1} parent=15 // pred_fallthru
          _
        // Predicated region
        $region29: #{tpu_custom_call.1} parent=15 // pred_check
          %p284 = pneg %p138
        $region30: #{tpu_custom_call.1} parent=15 // pred_check_branch
          %286 = sbr.rel (%p284) target = $region32
        $region31: #{tpu_custom_call.1} parent=15 // pred_region
          %p287 = scmp.lt.s32.totalorder %s27, 1
          %s288 = scalar_select %p287, %s27, 1
          %s289 = smul.addr %s288, 3
          %s290 = scalar_lea.vmem %s3, %s289
        $region32: #{tpu_custom_call.1} parent=15 // pred_fallthru
          _
        // Predicated region
        $region33: #{tpu_custom_call.1} parent=15 // pred_check
          %p291 = pneg %p164
        $region34: #{tpu_custom_call.1} parent=15 // pred_check_branch
          %293 = sbr.rel (%p291) target = $region36
        $region35: #{tpu_custom_call.1} parent=15 // pred_region
          %p294 = scmp.lt.s32.totalorder %s27, 1
          %s295 = scalar_select %p294, %s27, 1
          %s296 = scalar_lea.vmem %s4, %s295
        $region36: #{tpu_custom_call.1} parent=15 // pred_fallthru
          _
      $region16: #{tpu_custom_call.1} parent=5 // pred_fallthru
        _
      %p297 = scmp.le.s32.totalorder 1, %s20
      %p298 = scmp.lt.s32.totalorder %s20, 5
      %p299 = pnand %p297, %p298
      %p300 = pneg %p299
      // Predicated region
      $region37: #{tpu_custom_call.1} parent=5 // pred_check
        _
      $region38: #{tpu_custom_call.1} parent=5 // pred_check_branch
        %302 = sbr.rel (%p299) target = $region40
      $region39: #{tpu_custom_call.1} parent=5 // pred_region
        %s303 = ssub.s32 %s20, 1
        %s304 = sand.u32 %s79, 1
        %s305 = scalar_lea.sflag [#allocation5], %s304
        %s306 = sand.u32 %s79, 1
        %s307 = smul.addr %s306, 24
        %s308 = scalar_lea.vmem [#allocation4], %s307
        // Predicated region
        $region41: #{tpu_custom_call.1} parent=39 // pred_check
          %p309 = pneg %p92
        $region42: #{tpu_custom_call.1} parent=39 // pred_check_branch
          %311 = sbr.rel (%p309) target = $region44
        $region43: #{tpu_custom_call.1} parent=39 // pred_region
          %312 = dma.done %s305, 384
        $region44: #{tpu_custom_call.1} parent=39 // pred_fallthru
          _
        %s313 = sand.u32 %s105, 1
        %s314 = scalar_lea.sflag [#allocation8], %s313
        %s315 = sand.u32 %s105, 1
        %s316 = smul.addr %s315, 192
        %s317 = scalar_lea.vmem [#allocation7], %s316
        // Predicated region
        $region45: #{tpu_custom_call.1} parent=39 // pred_check
          %p318 = pneg %p118
        $region46: #{tpu_custom_call.1} parent=39 // pred_check_branch
          %320 = sbr.rel (%p318) target = $region48
        $region47: #{tpu_custom_call.1} parent=39 // pred_region
          %321 = dma.done %s314, 3072
        $region48: #{tpu_custom_call.1} parent=39 // pred_fallthru
          _
        %s322 = smul.u32 %s30, 2
        %s323 = ssub.s32 1, %s322
        %s324 = smul.u32 %s29, %s323
        %s325 = sadd.s32 %s30, %s324
        %s326 = smul.u32 4, %s325
        %p327 = scmp.lt.s32.totalorder %s326, 7
        %s328 = scalar_select %p327, %s326, 7
        %s329 = smul.addr %s328, 4
        %s330 = scalar_lea.vmem %s0, %s329
        %p331 = pneg %p66
        %p332 = pneg %p63
        %s333 = sand.u32 %s79, 1
        %s334 = scalar_lea.sflag [#allocation5], %s333
        %s335 = sand.u32 %s79, 1
        %s336 = smul.addr %s335, 24
        %s337 = scalar_lea.vmem [#allocation4], %s336
        %p338 = pneg %p92
        %p339 = pneg %p89
        %s340 = sand.u32 %s105, 1
        %s341 = scalar_lea.sflag [#allocation8], %s340
        %s342 = sand.u32 %s105, 1
        %s343 = smul.addr %s342, 192
        %s344 = scalar_lea.vmem [#allocation7], %s343
        %p345 = pneg %p118
        %p346 = pneg %p115
        %p347 = scmp.lt.s32.totalorder %s29, 1
        %s348 = scalar_select %p347, %s29, 1
        %s349 = smul.addr %s348, 3
        %s350 = scalar_lea.vmem %s3, %s349
        %p351 = pneg %p144
        %p352 = pneg %p141
        %p353 = scmp.lt.s32.totalorder %s29, 1
        %s354 = scalar_select %p353, %s29, 1
        %s355 = scalar_lea.vmem %s4, %s354
        %p356 = pneg %p170
        %p357 = pneg %p167
        %p358 = pneg %p206
        %p359 = pneg %p203
        %s360 = sand.u32 %s193, 1
        %s361 = scalar_lea.sflag [#allocation6], %s360
        %s362 = sand.u32 %s193, 1
        %s363 = smul.addr %s362, 32
        %s364 = scalar_lea.vmem [#allocation9], %s363
        %s365 = smul.u32 %s30, 2
        %s366 = ssub.s32 1, %s365
        %s367 = smul.u32 %s29, %s366
        %s368 = sadd.s32 %s30, %s367
        %s369 = smul.u32 4, %s368
        %p370 = scmp.lt.s32.totalorder %s369, 7
        %s371 = scalar_select %p370, %s369, 7
        %s372 = smul.addr %s371, 4
        %s373 = scalar_lea.vmem %s0, %s372
        %s374 = smul.u32 %s30, 2
        %s375 = ssub.s32 1, %s374
        %s376 = smul.u32 %s29, %s375
        %s377 = sadd.s32 %s30, %s376
        %s378 = smul.u32 4, %s377
        %p379 = scmp.lt.s32.totalorder %s29, 1
        %s380 = scalar_select %p379, %s29, 1
        %s381 = smul.addr %s380, 3
        %s382 = scalar_lea.vmem %s3, %s381
        %p383 = scmp.lt.s32.totalorder %s29, 1
        %s384 = scalar_select %p383, %s29, 1
        %s385 = scalar_lea.vmem %s4, %s384
        %s386 = smul.u32 %s30, 2
        %s387 = ssub.s32 1, %s386
        %s388 = smul.u32 %s29, %s387
        %s389 = sadd.s32 %s30, %s388
        %s390 = smul.u32 4, %s389
        %p392 = scmp.eq.s32.totalorder %s30, 0
        // Predicated region
        $region49: #{tpu_custom_call.1} parent=39 // pred_check
          %p393 = pneg %p392
        $region50: #{tpu_custom_call.1} parent=39 // pred_check_branch
          %395 = sbr.rel (%p393) target = $region52
        $region51: #{tpu_custom_call.1} parent=39 // pred_region
          %396 = vst [vmem:[#allocation3] sm:$0xff] 0.0
        $region52: #{tpu_custom_call.1} parent=39 // pred_fallthru
          _
        %v397 = vld [vmem:[%s373] sm:$0xf]
        %v398 = vld [vmem:[%s373 + $0x4] sm:$0xf]
        %v399 = vld [vmem:[%s373 + $0x8] sm:$0xf]
        %v400 = vld [vmem:[%s373 + $0xc] sm:$0xf]
        %v401 = vld [vmem:[%s308] sm:$0xff]
        %v402 = vld [vmem:[%s308 + $0x8] sm:$0xf]
        %v403 = vld [vmem:[%s308 + $0xc] sm:$0xff]
        %v404 = vld [vmem:[%s308 + $0x14] sm:$0xf]
        %v405 = vld [vmem:[%s382] sm:$0x7]
        %v407 = vlaneseq
        %v408 = vshrl.u32 %v407, 7
        %v409 = vsub.s32 0, %v408
        %v410 = vrot.slane %v405, %v409
        %v411 = vlaneseq
        %v412 = vshrl.u32 %v411, 7
        %v413 = vsub.s32 1, %v412
        %v414 = vrot.slane %v405, %v413
        %v415 = vlaneseq
        %v416 = vshrl.u32 %v415, 7
        %v417 = vsub.s32 2, %v416
        %v418 = vrot.slane %v405, %v417
        %v426 = vunpack.c.l.b16 %v397
        %v427 = vunpack.c.l.b16 %v398
        %v428 = vunpack.c.l.b16 %v399
        %v429 = vunpack.c.l.b16 %v400
        %v430 = vpack.c.b16 %v427, %v426
        %v431 = vpack.c.b16 %v429, %v428
        %v436 = vunpack.c.l.b16 %v401
        %v437 = vunpack.c.h.b16 %v401
        %v438 = vunpack.c.l.b16 %v402
        %v439 = vunpack.c.l.b16 %v403
        %v440 = vunpack.c.h.b16 %v403
        %v441 = vunpack.c.l.b16 %v404
        %v442 = vpack.c.b16 %v439, %v436
        %v443 = vpack.c.b16 %v440, %v437
        %v444 = vpack.c.b16 %v441, %v438
        %vm448 = vcmask 130048
        %v450 = vsel %vm448, %v430, 0
        %v453 = vsel %vm448, %v431, 0
        %455 = vmatprep.subr.bf16.mxu0 %v443
        %456 = vmatpush1.bf16.msra.mxu0 %v442
        %457 = vmatprep.subr.bf16.mxu0 0
        %458 = vmatpush1.bf16.msra.mxu0 0
        %459 = vmatprep.subr.bf16.mxu0 0
        %460 = vmatpush1.bf16.msra.mxu0 0
        %461 = vmatprep.subr.bf16.mxu0 0
        %462 = vmatpush1.bf16.msra.mxu0 0
        %463 = vmatprep.subr.bf16.mxu0 0
        %464 = vmatpush1.bf16.msra.mxu0 0
        %465 = vmatprep.subr.bf16.mxu0 0
        %466 = vmatpush1.bf16.msra.mxu0 0
        %467 = vmatprep.subr.bf16.mxu0 0
        %468 = vmatpush1.bf16.msra.mxu0 0
        %469 = vmatprep.subr.bf16.mxu0 0
        %470 = vmatpush1.bf16.msra.mxu0 0
        %471 = vmatprep.subr.bf16.mxu0 0
        %472 = vmatpush1.bf16.msra.mxu0 0
        %473 = vmatprep.subr.bf16.mxu0 0
        %474 = vmatpush1.bf16.msra.mxu0 0
        %475 = vmatprep.subr.bf16.mxu0 0
        %476 = vmatpush1.bf16.msra.mxu0 0
        %477 = vmatprep.subr.bf16.mxu0 0
        %478 = vmatpush1.bf16.msra.mxu0 0
        %479 = vmatprep.subr.bf16.mxu0 0
        %480 = vmatpush1.bf16.msra.mxu0 0
        %481 = vmatprep.subr.bf16.mxu0 0
        %482 = vmatpush1.bf16.msra.mxu0 0
        %483 = vmatprep.subr.bf16.mxu0 0
        %484 = vmatpush1.bf16.msra.mxu0 0
        %485 = vmatprep.subr.bf16.mxu0 0
        %486 = vmatpush1.bf16.msra.mxu0 0
        %487 = vmatprep.mubr.bf16.mxu0 0
        %488 = vmatmul.mubr.bf16.gmra.mrb[0].mxu0 %v450
        %v489 = vpop.f32.mrb[0].mxu0
        %v490 = vadd.f32 %v410, %v489
        %v491 = vpop.f32.mrb[0].mxu0
        %v492 = vadd.f32 %v414, %v491
        %v493 = vpop.f32.mrb[0].mxu0
        %v494 = vadd.f32 %v410, %v493
        %v495 = vpop.f32.mrb[0].mxu0
        %v496 = vadd.f32 %v414, %v495
        %497 = vmatprep.mubr.bf16.mxu0 0
        %498 = vmatmul.mubr.bf16.gmra.mrb[0].mxu0 %v453
        %v499 = vpop.f32.mrb[0].mxu0
        %v500 = vadd.f32 %v410, %v499
        %v501 = vpop.f32.mrb[0].mxu0
        %v502 = vadd.f32 %v414, %v501
        %v503 = vpop.f32.mrb[0].mxu0
        %v504 = vadd.f32 %v410, %v503
        %v505 = vpop.f32.mrb[0].mxu0
        %v506 = vadd.f32 %v414, %v505
        %507 = vdwg.mxu0
        %508 = vmatprep.subr.bf16.mxu0 0
        %509 = vmatpush1.bf16.msra.mxu0 %v444
        %510 = vmatprep.subr.bf16.mxu0 0
        %511 = vmatpush1.bf16.msra.mxu0 0
        %512 = vmatprep.subr.bf16.mxu0 0
        %513 = vmatpush1.bf16.msra.mxu0 0
        %514 = vmatprep.subr.bf16.mxu0 0
        %515 = vmatpush1.bf16.msra.mxu0 0
        %516 = vmatprep.subr.bf16.mxu0 0
        %517 = vmatpush1.bf16.msra.mxu0 0
        %518 = vmatprep.subr.bf16.mxu0 0
        %519 = vmatpush1.bf16.msra.mxu0 0
        %520 = vmatprep.subr.bf16.mxu0 0
        %521 = vmatpush1.bf16.msra.mxu0 0
        %522 = vmatprep.subr.bf16.mxu0 0
        %523 = vmatpush1.bf16.msra.mxu0 0
        %524 = vmatprep.subr.bf16.mxu0 0
        %525 = vmatpush1.bf16.msra.mxu0 0
        %526 = vmatprep.subr.bf16.mxu0 0
        %527 = vmatpush1.bf16.msra.mxu0 0
        %528 = vmatprep.subr.bf16.mxu0 0
        %529 = vmatpush1.bf16.msra.mxu0 0
        %530 = vmatprep.subr.bf16.mxu0 0
        %531 = vmatpush1.bf16.msra.mxu0 0
        %532 = vmatprep.subr.bf16.mxu0 0
        %533 = vmatpush1.bf16.msra.mxu0 0
        %534 = vmatprep.subr.bf16.mxu0 0
        %535 = vmatpush1.bf16.msra.mxu0 0
        %536 = vmatprep.subr.bf16.mxu0 0
        %537 = vmatpush1.bf16.msra.mxu0 0
        %538 = vmatprep.subr.bf16.mxu0 0
        %539 = vmatpush1.bf16.msra.mxu0 0
        %540 = vmatprep.mubr.bf16.mxu0 0
        %541 = vmatmul.mubr.bf16.gmra.mrb[0].mxu0 %v450
        %v542 = vpop.f32.mrb[0].mxu0
        %v543 = vadd.f32 %v418, %v542
        %v544 = vpop.f32.mrb[0].mxu0
        %v545 = vpop.f32.mrb[0].mxu0
        %v546 = vadd.f32 %v418, %v545
        %v547 = vpop.f32.mrb[0].mxu0
        %548 = vmatprep.mubr.bf16.mxu0 0
        %549 = vmatmul.mubr.bf16.gmra.mrb[0].mxu0 %v453
        %v550 = vpop.f32.mrb[0].mxu0
        %v551 = vadd.f32 %v418, %v550
        %v552 = vpop.f32.mrb[0].mxu0
        %v553 = vpop.f32.mrb[0].mxu0
        %v554 = vadd.f32 %v418, %v553
        %v555 = vpop.f32.mrb[0].mxu0
        %556 = vdwg.mxu0
        %557 = vst [vmem:[#allocation2] sm:$0xff] %v490
        %558 = vst [vmem:[#allocation2 + $0x8] sm:$0xff] %v492
        %559 = vst [vmem:[#allocation2 + $0x10] sm:$0xff] %v543
        %560 = vst [vmem:[#allocation2 + $0x18] sm:$0xff] %v494
        %561 = vst [vmem:[#allocation2 + $0x20] sm:$0xff] %v496
        %562 = vst [vmem:[#allocation2 + $0x28] sm:$0xff] %v546
        %563 = vst [vmem:[#allocation2 + $0x30] sm:$0xff] %v500
        %564 = vst [vmem:[#allocation2 + $0x38] sm:$0xff] %v502
        %565 = vst [vmem:[#allocation2 + $0x40] sm:$0xff] %v551
        %566 = vst [vmem:[#allocation2 + $0x48] sm:$0xff] %v504
        %567 = vst [vmem:[#allocation2 + $0x50] sm:$0xff] %v506
        %568 = vst [vmem:[#allocation2 + $0x58] sm:$0xff] %v554
        %v569 = vld [vmem:[%s317] sm:$0xff]
        %v570 = vld [vmem:[%s317 + $0x8] sm:$0xf]
        %v571 = vld [vmem:[%s317 + $0xc] sm:$0xff]
        %v572 = vld [vmem:[%s317 + $0x14] sm:$0xf]
        %v573 = vld [vmem:[%s317 + $0x18] sm:$0xff]
        %v574 = vld [vmem:[%s317 + $0x20] sm:$0xf]
        %v575 = vld [vmem:[%s317 + $0x24] sm:$0xff]
        %v576 = vld [vmem:[%s317 + $0x2c] sm:$0xf]
        %v577 = vld [vmem:[%s317 + $0x30] sm:$0xff]
        %v578 = vld [vmem:[%s317 + $0x38] sm:$0xf]
        %v579 = vld [vmem:[%s317 + $0x3c] sm:$0xff]
        %v580 = vld [vmem:[%s317 + $0x44] sm:$0xf]
        %v581 = vld [vmem:[%s317 + $0x48] sm:$0xff]
        %v582 = vld [vmem:[%s317 + $0x50] sm:$0xf]
        %v583 = vld [vmem:[%s317 + $0x54] sm:$0xff]
        %v584 = vld [vmem:[%s317 + $0x5c] sm:$0xf]
        %v585 = vld [vmem:[%s317 + $0x60] sm:$0xff]
        %v586 = vld [vmem:[%s317 + $0x68] sm:$0xf]
        %v587 = vld [vmem:[%s317 + $0x6c] sm:$0xff]
        %v588 = vld [vmem:[%s317 + $0x74] sm:$0xf]
        %v589 = vld [vmem:[%s317 + $0x78] sm:$0xff]
        %v590 = vld [vmem:[%s317 + $0x80] sm:$0xf]
        %v591 = vld [vmem:[%s317 + $0x84] sm:$0xff]
        %v592 = vld [vmem:[%s317 + $0x8c] sm:$0xf]
        %v593 = vld [vmem:[%s317 + $0x90] sm:$0xff]
        %v594 = vld [vmem:[%s317 + $0x98] sm:$0xf]
        %v595 = vld [vmem:[%s317 + $0x9c] sm:$0xff]
        %v596 = vld [vmem:[%s317 + $0xa4] sm:$0xf]
        %v597 = vld [vmem:[%s317 + $0xa8] sm:$0xff]
        %v598 = vld [vmem:[%s317 + $0xb0] sm:$0xf]
        %v599 = vld [vmem:[%s317 + $0xb4] sm:$0xff]
        %v600 = vld [vmem:[%s317 + $0xbc] sm:$0xf]
        %v601 = vld [vmem:[%s385] sm:$0x1]
        %v603 = vlaneseq
        %v604 = vshrl.u32 %v603, 7
        %v605 = vsub.s32 0, %v604
        %v606 = vrot.slane %v601, %v605
        %p608 = scmp.eq.s32.totalorder %s29, 0
        // Predicated region
        $region53: #{tpu_custom_call.1} parent=39 // pred_check
          %p609 = pneg %p608
        $region54: #{tpu_custom_call.1} parent=39 // pred_check_branch
          %611 = sbr.rel (%p609) target = $region56
        $region55: #{tpu_custom_call.1} parent=39 // pred_region
          %v612 = vld [vmem:[#allocation3] sm:$0xff]
          %s613 = smul.u32 0, 3
          %s614 = smul.addr %s613, 8
          %s615 = scalar_lea.vmem [#allocation2], %s614
          %v616 = vld [vmem:[%s615] sm:$0xff]
          %v617 = vld [vmem:[%s615 + $0x8] sm:$0xff]
          %v618 = vld [vmem:[%s615 + $0x10] sm:$0xff]
          %v619 = vpack.c.bf16 %v612, %v612
          %v652 = vunpack.c.l.b16 %v569
          %v653 = vunpack.c.h.b16 %v569
          %v654 = vunpack.c.l.b16 %v570
          %v655 = vunpack.c.l.b16 %v571
          %v656 = vunpack.c.h.b16 %v571
          %v657 = vunpack.c.l.b16 %v572
          %v658 = vunpack.c.l.b16 %v573
          %v659 = vunpack.c.h.b16 %v573
          %v660 = vunpack.c.l.b16 %v574
          %v661 = vunpack.c.l.b16 %v575
          %v662 = vunpack.c.h.b16 %v575
          %v663 = vunpack.c.l.b16 %v576
          %v664 = vunpack.c.l.b16 %v577
          %v665 = vunpack.c.h.b16 %v577
          %v666 = vunpack.c.l.b16 %v578
          %v667 = vunpack.c.l.b16 %v579
          %v668 = vunpack.c.h.b16 %v579
          %v669 = vunpack.c.l.b16 %v580
          %v670 = vunpack.c.l.b16 %v581
          %v671 = vunpack.c.h.b16 %v581
          %v672 = vunpack.c.l.b16 %v582
          %v673 = vunpack.c.l.b16 %v583
          %v674 = vunpack.c.h.b16 %v583
          %v675 = vunpack.c.l.b16 %v584
          %v676 = vunpack.c.l.b16 %v585
          %v677 = vunpack.c.h.b16 %v585
          %v678 = vunpack.c.l.b16 %v586
          %v679 = vunpack.c.l.b16 %v587
          %v680 = vunpack.c.h.b16 %v587
          %v681 = vunpack.c.l.b16 %v588
          %v682 = vunpack.c.l.b16 %v589
          %v683 = vunpack.c.h.b16 %v589
          %v684 = vunpack.c.l.b16 %v590
          %v685 = vunpack.c.l.b16 %v591
          %v686 = vunpack.c.h.b16 %v591
          %v687 = vunpack.c.l.b16 %v592
          %v688 = vunpack.c.l.b16 %v593
          %v689 = vunpack.c.h.b16 %v593
          %v690 = vunpack.c.l.b16 %v594
          %v691 = vunpack.c.l.b16 %v595
          %v692 = vunpack.c.h.b16 %v595
          %v693 = vunpack.c.l.b16 %v596
          %v694 = vunpack.c.l.b16 %v597
          %v695 = vunpack.c.h.b16 %v597
          %v696 = vunpack.c.l.b16 %v598
          %v697 = vunpack.c.l.b16 %v599
          %v698 = vunpack.c.h.b16 %v599
          %v699 = vunpack.c.l.b16 %v600
          %v700 = vpack.c.b16 %v655, %v652
          %v701 = vpack.c.b16 %v656, %v653
          %v702 = vpack.c.b16 %v657, %v654
          %v703 = vpack.c.b16 %v661, %v658
          %v704 = vpack.c.b16 %v662, %v659
          %v705 = vpack.c.b16 %v663, %v660
          %v706 = vpack.c.b16 %v667, %v664
          %v707 = vpack.c.b16 %v668, %v665
          %v708 = vpack.c.b16 %v669, %v666
          %v709 = vpack.c.b16 %v673, %v670
          %v710 = vpack.c.b16 %v674, %v671
          %v711 = vpack.c.b16 %v675, %v672
          %v712 = vpack.c.b16 %v679, %v676
          %v713 = vpack.c.b16 %v680, %v677
          %v714 = vpack.c.b16 %v681, %v678
          %v715 = vpack.c.b16 %v685, %v682
          %v716 = vpack.c.b16 %v686, %v683
          %v717 = vpack.c.b16 %v687, %v684
          %v718 = vpack.c.b16 %v691, %v688
          %v719 = vpack.c.b16 %v692, %v689
          %v720 = vpack.c.b16 %v693, %v690
          %v721 = vpack.c.b16 %v697, %v694
          %v722 = vpack.c.b16 %v698, %v695
          %v723 = vpack.c.b16 %v699, %v696
          %748 = vmatprep.subr.bf16.mxu0 %v701
          %749 = vmatpush1.bf16.msra.mxu0 %v700
          %750 = vmatprep.subr.bf16.mxu0 %v704
          %751 = vmatpush1.bf16.msra.mxu0 %v703
          %752 = vmatprep.subr.bf16.mxu0 %v707
          %753 = vmatpush1.bf16.msra.mxu0 %v706
          %754 = vmatprep.subr.bf16.mxu0 %v710
          %755 = vmatpush1.bf16.msra.mxu0 %v709
          %756 = vmatprep.subr.bf16.mxu0 %v713
          %757 = vmatpush1.bf16.msra.mxu0 %v712
          %758 = vmatprep.subr.bf16.mxu0 %v716
          %759 = vmatpush1.bf16.msra.mxu0 %v715
          %760 = vmatprep.subr.bf16.mxu0 %v719
          %761 = vmatpush1.bf16.msra.mxu0 %v718
          %762 = vmatprep.subr.bf16.mxu0 %v722
          %763 = vmatpush1.bf16.msra.mxu0 %v721
          %764 = vmatprep.subr.bf16.mxu0 0
          %765 = vmatpush1.bf16.msra.mxu0 0
          %766 = vmatprep.subr.bf16.mxu0 0
          %767 = vmatpush1.bf16.msra.mxu0 0
          %768 = vmatprep.subr.bf16.mxu0 0
          %769 = vmatpush1.bf16.msra.mxu0 0
          %770 = vmatprep.subr.bf16.mxu0 0
          %771 = vmatpush1.bf16.msra.mxu0 0
          %772 = vmatprep.subr.bf16.mxu0 0
          %773 = vmatpush1.bf16.msra.mxu0 0
          %774 = vmatprep.subr.bf16.mxu0 0
          %775 = vmatpush1.bf16.msra.mxu0 0
          %776 = vmatprep.subr.bf16.mxu0 0
          %777 = vmatpush1.bf16.msra.mxu0 0
          %778 = vmatprep.subr.bf16.mxu0 0
          %779 = vmatpush1.bf16.msra.mxu0 0
          %780 = vmatprep.mubr.bf16.mxu0 0
          %781 = vmatmul.mubr.bf16.gmra.mrb[0].mxu0 %v619
          %v782 = vpop.f32.mrb[0].mxu0
          %v783 = vadd.f32 0.0, %v782
          %v784 = vpop.f32.mrb[0].mxu0
          %v785 = vadd.f32 0.0, %v784
          %v786 = vpop.f32.mrb[0].mxu0
          %v787 = vpop.f32.mrb[0].mxu0
          %788 = vdwg.mxu0
          %789 = vmatprep.subr.bf16.mxu0 0
          %790 = vmatpush1.bf16.msra.mxu0 %v702
          %791 = vmatprep.subr.bf16.mxu0 0
          %792 = vmatpush1.bf16.msra.mxu0 %v705
          %793 = vmatprep.subr.bf16.mxu0 0
          %794 = vmatpush1.bf16.msra.mxu0 %v708
          %795 = vmatprep.subr.bf16.mxu0 0
          %796 = vmatpush1.bf16.msra.mxu0 %v711
          %797 = vmatprep.subr.bf16.mxu0 0
          %798 = vmatpush1.bf16.msra.mxu0 %v714
          %799 = vmatprep.subr.bf16.mxu0 0
          %800 = vmatpush1.bf16.msra.mxu0 %v717
          %801 = vmatprep.subr.bf16.mxu0 0
          %802 = vmatpush1.bf16.msra.mxu0 %v720
          %803 = vmatprep.subr.bf16.mxu0 0
          %804 = vmatpush1.bf16.msra.mxu0 %v723
          %805 = vmatprep.subr.bf16.mxu0 0
          %806 = vmatpush1.bf16.msra.mxu0 0
          %807 = vmatprep.subr.bf16.mxu0 0
          %808 = vmatpush1.bf16.msra.mxu0 0
          %809 = vmatprep.subr.bf16.mxu0 0
          %810 = vmatpush1.bf16.msra.mxu0 0
          %811 = vmatprep.subr.bf16.mxu0 0
          %812 = vmatpush1.bf16.msra.mxu0 0
          %813 = vmatprep.subr.bf16.mxu0 0
          %814 = vmatpush1.bf16.msra.mxu0 0
          %815 = vmatprep.subr.bf16.mxu0 0
          %816 = vmatpush1.bf16.msra.mxu0 0
          %817 = vmatprep.subr.bf16.mxu0 0
          %818 = vmatpush1.bf16.msra.mxu0 0
          %819 = vmatprep.subr.bf16.mxu0 0
          %820 = vmatpush1.bf16.msra.mxu0 0
          %821 = vmatprep.mubr.bf16.mxu0 0
          %822 = vmatmul.mubr.bf16.gmra.mrb[0].mxu0 %v619
          %v823 = vpop.f32.mrb[0].mxu0
          %v824 = vadd.f32 0.0, %v823
          %v825 = vpop.f32.mrb[0].mxu0
          %v826 = vpop.f32.mrb[0].mxu0
          %v827 = vpop.f32.mrb[0].mxu0
          %828 = vdwg.mxu0
          %v829 = vadd.f32 %v616, %v783
          %v830 = vxor.u32 %v829, 2147483648
          %v831 = vmul.f32 %v830, 1.442695
          %v832 = vpow.pop %v831
          %v833 = vadd.f32 %v832, 1.0
          %v834 = vrcp.pop %v833
          %v835 = vmul.f32 1.0, %v834
          %v836 = vadd.f32 %v617, %v785
          %v837 = vxor.u32 %v836, 2147483648
          %v838 = vmul.f32 %v837, 1.442695
          %v839 = vpow.pop %v838
          %v840 = vadd.f32 %v839, 1.0
          %v841 = vrcp.pop %v840
          %v842 = vmul.f32 1.0, %v841
          %v843 = vadd.f32 %v824, %v606
          %v844 = vmul.f32 %v835, %v843
          %v845 = vadd.f32 %v618, %v844
          %v846 = vtanh.pop %v845
          %v847 = vsub.f32 1.0, %v842
          %v848 = vmul.f32 %v847, %v846
          %v849 = vmul.f32 %v842, %v612
          %v850 = vadd.f32 %v848, %v849
          %851 = vst [vmem:[%s364] sm:$0xff] %v850
          %s852 = smul.u32 1, 3
          %s853 = smul.addr %s852, 8
          %s854 = scalar_lea.vmem [#allocation2], %s853
          %v855 = vld [vmem:[%s854] sm:$0xff]
          %v856 = vld [vmem:[%s854 + $0x8] sm:$0xff]
          %v857 = vld [vmem:[%s854 + $0x10] sm:$0xff]
          %v858 = vpack.c.bf16 %v850, %v850
          %859 = vmatprep.subr.bf16.mxu0 %v701
          %860 = vmatpush1.bf16.msra.mxu0 %v700
          %861 = vmatprep.subr.bf16.mxu0 %v704
          %862 = vmatpush1.bf16.msra.mxu0 %v703
          %863 = vmatprep.subr.bf16.mxu0 %v707
          %864 = vmatpush1.bf16.msra.mxu0 %v706
          %865 = vmatprep.subr.bf16.mxu0 %v710
          %866 = vmatpush1.bf16.msra.mxu0 %v709
          %867 = vmatprep.subr.bf16.mxu0 %v713
          %868 = vmatpush1.bf16.msra.mxu0 %v712
          %869 = vmatprep.subr.bf16.mxu0 %v716
          %870 = vmatpush1.bf16.msra.mxu0 %v715
          %871 = vmatprep.subr.bf16.mxu0 %v719
          %872 = vmatpush1.bf16.msra.mxu0 %v718
          %873 = vmatprep.subr.bf16.mxu0 %v722
          %874 = vmatpush1.bf16.msra.mxu0 %v721
          %875 = vmatprep.subr.bf16.mxu0 0
          %876 = vmatpush1.bf16.msra.mxu0 0
          %877 = vmatprep.subr.bf16.mxu0 0
          %878 = vmatpush1.bf16.msra.mxu0 0
          %879 = vmatprep.subr.bf16.mxu0 0
          %880 = vmatpush1.bf16.msra.mxu0 0
          %881 = vmatprep.subr.bf16.mxu0 0
          %882 = vmatpush1.bf16.msra.mxu0 0
          %883 = vmatprep.subr.bf16.mxu0 0
          %884 = vmatpush1.bf16.msra.mxu0 0
          %885 = vmatprep.subr.bf16.mxu0 0
          %886 = vmatpush1.bf16.msra.mxu0 0
          %887 = vmatprep.subr.bf16.mxu0 0
          %888 = vmatpush1.bf16.msra.mxu0 0
          %889 = vmatprep.subr.bf16.mxu0 0
          %890 = vmatpush1.bf16.msra.mxu0 0
          %891 = vmatprep.mubr.bf16.mxu0 0
          %892 = vmatmul.mubr.bf16.gmra.mrb[0].mxu0 %v858
          %v893 = vpop.f32.mrb[0].mxu0
          %v894 = vadd.f32 0.0, %v893
          %v895 = vpop.f32.mrb[0].mxu0
          %v896 = vadd.f32 0.0, %v895
          %v897 = vpop.f32.mrb[0].mxu0
          %v898 = vpop.f32.mrb[0].mxu0
          %899 = vdwg.mxu0
          %900 = vmatprep.subr.bf16.mxu0 0
          %901 = vmatpush1.bf16.msra.mxu0 %v702
          %902 = vmatprep.subr.bf16.mxu0 0
          %903 = vmatpush1.bf16.msra.mxu0 %v705
          %904 = vmatprep.subr.bf16.mxu0 0
          %905 = vmatpush1.bf16.msra.mxu0 %v708
          %906 = vmatprep.subr.bf16.mxu0 0
          %907 = vmatpush1.bf16.msra.mxu0 %v711
          %908 = vmatprep.subr.bf16.mxu0 0
          %909 = vmatpush1.bf16.msra.mxu0 %v714
          %910 = vmatprep.subr.bf16.mxu0 0
          %911 = vmatpush1.bf16.msra.mxu0 %v717
          %912 = vmatprep.subr.bf16.mxu0 0
          %913 = vmatpush1.bf16.msra.mxu0 %v720
          %914 = vmatprep.subr.bf16.mxu0 0
          %915 = vmatpush1.bf16.msra.mxu0 %v723
          %916 = vmatprep.subr.bf16.mxu0 0
          %917 = vmatpush1.bf16.msra.mxu0 0
          %918 = vmatprep.subr.bf16.mxu0 0
          %919 = vmatpush1.bf16.msra.mxu0 0
          %920 = vmatprep.subr.bf16.mxu0 0
          %921 = vmatpush1.bf16.msra.mxu0 0
          %922 = vmatprep.subr.bf16.mxu0 0
          %923 = vmatpush1.bf16.msra.mxu0 0
          %924 = vmatprep.subr.bf16.mxu0 0
          %925 = vmatpush1.bf16.msra.mxu0 0
          %926 = vmatprep.subr.bf16.mxu0 0
          %927 = vmatpush1.bf16.msra.mxu0 0
          %928 = vmatprep.subr.bf16.mxu0 0
          %929 = vmatpush1.bf16.msra.mxu0 0
          %930 = vmatprep.subr.bf16.mxu0 0
          %931 = vmatpush1.bf16.msra.mxu0 0
          %932 = vmatprep.mubr.bf16.mxu0 0
          %933 = vmatmul.mubr.bf16.gmra.mrb[0].mxu0 %v858
          %v934 = vpop.f32.mrb[0].mxu0
          %v935 = vadd.f32 0.0, %v934
          %v936 = vpop.f32.mrb[0].mxu0
          %v937 = vpop.f32.mrb[0].mxu0
          %v938 = vpop.f32.mrb[0].mxu0
          %939 = vdwg.mxu0
          %v940 = vadd.f32 %v855, %v894
          %v941 = vxor.u32 %v940, 2147483648
          %v942 = vmul.f32 %v941, 1.442695
          %v943 = vpow.pop %v942
          %v944 = vadd.f32 %v943, 1.0
          %v945 = vrcp.pop %v944
          %v946 = vmul.f32 1.0, %v945
          %v947 = vadd.f32 %v856, %v896
          %v948 = vxor.u32 %v947, 2147483648
          %v949 = vmul.f32 %v948, 1.442695
          %v950 = vpow.pop %v949
          %v951 = vadd.f32 %v950, 1.0
          %v952 = vrcp.pop %v951
          %v953 = vmul.f32 1.0, %v952
          %v954 = vadd.f32 %v935, %v606
          %v955 = vmul.f32 %v946, %v954
          %v956 = vadd.f32 %v857, %v955
          %v957 = vtanh.pop %v956
          %v958 = vsub.f32 1.0, %v953
          %v959 = vmul.f32 %v958, %v957
          %v960 = vmul.f32 %v953, %v850
          %v961 = vadd.f32 %v959, %v960
          %s962 = scalar_lea.vmem %s364, 8 [#allocation9]
          %963 = vst [vmem:[%s962] sm:$0xff] %v961
          %s964 = smul.u32 2, 3
          %s965 = smul.addr %s964, 8
          %s966 = scalar_lea.vmem [#allocation2], %s965
          %v967 = vld [vmem:[%s966] sm:$0xff]
          %v968 = vld [vmem:[%s966 + $0x8] sm:$0xff]
          %v969 = vld [vmem:[%s966 + $0x10] sm:$0xff]
          %v970 = vpack.c.bf16 %v961, %v961
          %971 = vmatprep.subr.bf16.mxu0 %v701
          %972 = vmatpush1.bf16.msra.mxu0 %v700
          %973 = vmatprep.subr.bf16.mxu0 %v704
          %974 = vmatpush1.bf16.msra.mxu0 %v703
          %975 = vmatprep.subr.bf16.mxu0 %v707
          %976 = vmatpush1.bf16.msra.mxu0 %v706
          %977 = vmatprep.subr.bf16.mxu0 %v710
          %978 = vmatpush1.bf16.msra.mxu0 %v709
          %979 = vmatprep.subr.bf16.mxu0 %v713
          %980 = vmatpush1.bf16.msra.mxu0 %v712
          %981 = vmatprep.subr.bf16.mxu0 %v716
          %982 = vmatpush1.bf16.msra.mxu0 %v715
          %983 = vmatprep.subr.bf16.mxu0 %v719
          %984 = vmatpush1.bf16.msra.mxu0 %v718
          %985 = vmatprep.subr.bf16.mxu0 %v722
          %986 = vmatpush1.bf16.msra.mxu0 %v721
          %987 = vmatprep.subr.bf16.mxu0 0
          %988 = vmatpush1.bf16.msra.mxu0 0
          %989 = vmatprep.subr.bf16.mxu0 0
          %990 = vmatpush1.bf16.msra.mxu0 0
          %991 = vmatprep.subr.bf16.mxu0 0
          %992 = vmatpush1.bf16.msra.mxu0 0
          %993 = vmatprep.subr.bf16.mxu0 0
          %994 = vmatpush1.bf16.msra.mxu0 0
          %995 = vmatprep.subr.bf16.mxu0 0
          %996 = vmatpush1.bf16.msra.mxu0 0
          %997 = vmatprep.subr.bf16.mxu0 0
          %998 = vmatpush1.bf16.msra.mxu0 0
          %999 = vmatprep.subr.bf16.mxu0 0
          %1000 = vmatpush1.bf16.msra.mxu0 0
          %1001 = vmatprep.subr.bf16.mxu0 0
          %1002 = vmatpush1.bf16.msra.mxu0 0
          %1003 = vmatprep.mubr.bf16.mxu0 0
          %1004 = vmatmul.mubr.bf16.gmra.mrb[0].mxu0 %v970
          %v1005 = vpop.f32.mrb[0].mxu0
          %v1006 = vadd.f32 0.0, %v1005
          %v1007 = vpop.f32.mrb[0].mxu0
          %v1008 = vadd.f32 0.0, %v1007
          %v1009 = vpop.f32.mrb[0].mxu0
          %v1010 = vpop.f32.mrb[0].mxu0
          %1011 = vdwg.mxu0
          %1012 = vmatprep.subr.bf16.mxu0 0
          %1013 = vmatpush1.bf16.msra.mxu0 %v702
          %1014 = vmatprep.subr.bf16.mxu0 0
          %1015 = vmatpush1.bf16.msra.mxu0 %v705
          %1016 = vmatprep.subr.bf16.mxu0 0
          %1017 = vmatpush1.bf16.msra.mxu0 %v708
          %1018 = vmatprep.subr.bf16.mxu0 0
          %1019 = vmatpush1.bf16.msra.mxu0 %v711
          %1020 = vmatprep.subr.bf16.mxu0 0
          %1021 = vmatpush1.bf16.msra.mxu0 %v714
          %1022 = vmatprep.subr.bf16.mxu0 0
          %1023 = vmatpush1.bf16.msra.mxu0 %v717
          %1024 = vmatprep.subr.bf16.mxu0 0
          %1025 = vmatpush1.bf16.msra.mxu0 %v720
          %1026 = vmatprep.subr.bf16.mxu0 0
          %1027 = vmatpush1.bf16.msra.mxu0 %v723
          %1028 = vmatprep.subr.bf16.mxu0 0
          %1029 = vmatpush1.bf16.msra.mxu0 0
          %1030 = vmatprep.subr.bf16.mxu0 0
          %1031 = vmatpush1.bf16.msra.mxu0 0
          %1032 = vmatprep.subr.bf16.mxu0 0
          %1033 = vmatpush1.bf16.msra.mxu0 0
          %1034 = vmatprep.subr.bf16.mxu0 0
          %1035 = vmatpush1.bf16.msra.mxu0 0
          %1036 = vmatprep.subr.bf16.mxu0 0
          %1037 = vmatpush1.bf16.msra.mxu0 0
          %1038 = vmatprep.subr.bf16.mxu0 0
          %1039 = vmatpush1.bf16.msra.mxu0 0
          %1040 = vmatprep.subr.bf16.mxu0 0
          %1041 = vmatpush1.bf16.msra.mxu0 0
          %1042 = vmatprep.subr.bf16.mxu0 0
          %1043 = vmatpush1.bf16.msra.mxu0 0
          %1044 = vmatprep.mubr.bf16.mxu0 0
          %1045 = vmatmul.mubr.bf16.gmra.mrb[0].mxu0 %v970
          %v1046 = vpop.f32.mrb[0].mxu0
          %v1047 = vadd.f32 0.0, %v1046
          %v1048 = vpop.f32.mrb[0].mxu0
          %v1049 = vpop.f32.mrb[0].mxu0
          %v1050 = vpop.f32.mrb[0].mxu0
          %1051 = vdwg.mxu0
          %v1052 = vadd.f32 %v967, %v1006
          %v1053 = vxor.u32 %v1052, 2147483648
          %v1054 = vmul.f32 %v1053, 1.442695
          %v1055 = vpow.pop %v1054
          %v1056 = vadd.f32 %v1055, 1.0
          %v1057 = vrcp.pop %v1056
          %v1058 = vmul.f32 1.0, %v1057
          %v1059 = vadd.f32 %v968, %v1008
          %v1060 = vxor.u32 %v1059, 2147483648
          %v1061 = vmul.f32 %v1060, 1.442695
          %v1062 = vpow.pop %v1061
          %v1063 = vadd.f32 %v1062, 1.0
          %v1064 = vrcp.pop %v1063
          %v1065 = vmul.f32 1.0, %v1064
          %v1066 = vadd.f32 %v1047, %v606
          %v1067 = vmul.f32 %v1058, %v1066
          %v1068 = vadd.f32 %v969, %v1067
          %v1069 = vtanh.pop %v1068
          %v1070 = vsub.f32 1.0, %v1065
          %v1071 = vmul.f32 %v1070, %v1069
          %v1072 = vmul.f32 %v1065, %v961
          %v1073 = vadd.f32 %v1071, %v1072
          %s1074 = scalar_lea.vmem %s364, 16 [#allocation9]
          %1075 = vst [vmem:[%s1074] sm:$0xff] %v1073
          %s1076 = smul.u32 3, 3
          %s1077 = smul.addr %s1076, 8
          %s1078 = scalar_lea.vmem [#allocation2], %s1077
          %v1079 = vld [vmem:[%s1078] sm:$0xff]
          %v1080 = vld [vmem:[%s1078 + $0x8] sm:$0xff]
          %v1081 = vld [vmem:[%s1078 + $0x10] sm:$0xff]
          %v1082 = vpack.c.bf16 %v1073, %v1073
          %1083 = vmatprep.subr.bf16.mxu0 %v701
          %1084 = vmatpush1.bf16.msra.mxu0 %v700
          %1085 = vmatprep.subr.bf16.mxu0 %v704
          %1086 = vmatpush1.bf16.msra.mxu0 %v703
          %1087 = vmatprep.subr.bf16.mxu0 %v707
          %1088 = vmatpush1.bf16.msra.mxu0 %v706
          %1089 = vmatprep.subr.bf16.mxu0 %v710
          %1090 = vmatpush1.bf16.msra.mxu0 %v709
          %1091 = vmatprep.subr.bf16.mxu0 %v713
          %1092 = vmatpush1.bf16.msra.mxu0 %v712
          %1093 = vmatprep.subr.bf16.mxu0 %v716
          %1094 = vmatpush1.bf16.msra.mxu0 %v715
          %1095 = vmatprep.subr.bf16.mxu0 %v719
          %1096 = vmatpush1.bf16.msra.mxu0 %v718
          %1097 = vmatprep.subr.bf16.mxu0 %v722
          %1098 = vmatpush1.bf16.msra.mxu0 %v721
          %1099 = vmatprep.subr.bf16.mxu0 0
          %1100 = vmatpush1.bf16.msra.mxu0 0
          %1101 = vmatprep.subr.bf16.mxu0 0
          %1102 = vmatpush1.bf16.msra.mxu0 0
          %1103 = vmatprep.subr.bf16.mxu0 0
          %1104 = vmatpush1.bf16.msra.mxu0 0
          %1105 = vmatprep.subr.bf16.mxu0 0
          %1106 = vmatpush1.bf16.msra.mxu0 0
          %1107 = vmatprep.subr.bf16.mxu0 0
          %1108 = vmatpush1.bf16.msra.mxu0 0
          %1109 = vmatprep.subr.bf16.mxu0 0
          %1110 = vmatpush1.bf16.msra.mxu0 0
          %1111 = vmatprep.subr.bf16.mxu0 0
          %1112 = vmatpush1.bf16.msra.mxu0 0
          %1113 = vmatprep.subr.bf16.mxu0 0
          %1114 = vmatpush1.bf16.msra.mxu0 0
          %1115 = vmatprep.mubr.bf16.mxu0 0
          %1116 = vmatmul.mubr.bf16.gmra.mrb[0].mxu0 %v1082
          %v1117 = vpop.f32.mrb[0].mxu0
          %v1118 = vadd.f32 0.0, %v1117
          %v1119 = vpop.f32.mrb[0].mxu0
          %v1120 = vadd.f32 0.0, %v1119
          %v1121 = vpop.f32.mrb[0].mxu0
          %v1122 = vpop.f32.mrb[0].mxu0
          %1123 = vdwg.mxu0
          %1124 = vmatprep.subr.bf16.mxu0 0
          %1125 = vmatpush1.bf16.msra.mxu0 %v702
          %1126 = vmatprep.subr.bf16.mxu0 0
          %1127 = vmatpush1.bf16.msra.mxu0 %v705
          %1128 = vmatprep.subr.bf16.mxu0 0
          %1129 = vmatpush1.bf16.msra.mxu0 %v708
          %1130 = vmatprep.subr.bf16.mxu0 0
          %1131 = vmatpush1.bf16.msra.mxu0 %v711
          %1132 = vmatprep.subr.bf16.mxu0 0
          %1133 = vmatpush1.bf16.msra.mxu0 %v714
          %1134 = vmatprep.subr.bf16.mxu0 0
          %1135 = vmatpush1.bf16.msra.mxu0 %v717
          %1136 = vmatprep.subr.bf16.mxu0 0
          %1137 = vmatpush1.bf16.msra.mxu0 %v720
          %1138 = vmatprep.subr.bf16.mxu0 0
          %1139 = vmatpush1.bf16.msra.mxu0 %v723
          %1140 = vmatprep.subr.bf16.mxu0 0
          %1141 = vmatpush1.bf16.msra.mxu0 0
          %1142 = vmatprep.subr.bf16.mxu0 0
          %1143 = vmatpush1.bf16.msra.mxu0 0
          %1144 = vmatprep.subr.bf16.mxu0 0
          %1145 = vmatpush1.bf16.msra.mxu0 0
          %1146 = vmatprep.subr.bf16.mxu0 0
          %1147 = vmatpush1.bf16.msra.mxu0 0
          %1148 = vmatprep.subr.bf16.mxu0 0
          %1149 = vmatpush1.bf16.msra.mxu0 0
          %1150 = vmatprep.subr.bf16.mxu0 0
          %1151 = vmatpush1.bf16.msra.mxu0 0
          %1152 = vmatprep.subr.bf16.mxu0 0
          %1153 = vmatpush1.bf16.msra.mxu0 0
          %1154 = vmatprep.subr.bf16.mxu0 0
          %1155 = vmatpush1.bf16.msra.mxu0 0
          %1156 = vmatprep.mubr.bf16.mxu0 0
          %1157 = vmatmul.mubr.bf16.gmra.mrb[0].mxu0 %v1082
          %v1158 = vpop.f32.mrb[0].mxu0
          %v1159 = vadd.f32 0.0, %v1158
          %v1160 = vpop.f32.mrb[0].mxu0
          %v1161 = vpop.f32.mrb[0].mxu0
          %v1162 = vpop.f32.mrb[0].mxu0
          %1163 = vdwg.mxu0
          %v1164 = vadd.f32 %v1079, %v1118
          %v1165 = vxor.u32 %v1164, 2147483648
          %v1166 = vmul.f32 %v1165, 1.442695
          %v1167 = vpow.pop %v1166
          %v1168 = vadd.f32 %v1167, 1.0
          %v1169 = vrcp.pop %v1168
          %v1170 = vmul.f32 1.0, %v1169
          %v1171 = vadd.f32 %v1080, %v1120
          %v1172 = vxor.u32 %v1171, 2147483648
          %v1173 = vmul.f32 %v1172, 1.442695
          %v1174 = vpow.pop %v1173
          %v1175 = vadd.f32 %v1174, 1.0
          %v1176 = vrcp.pop %v1175
          %v1177 = vmul.f32 1.0, %v1176
          %v1178 = vadd.f32 %v1159, %v606
          %v1179 = vmul.f32 %v1170, %v1178
          %v1180 = vadd.f32 %v1081, %v1179
          %v1181 = vtanh.pop %v1180
          %v1182 = vsub.f32 1.0, %v1177
          %v1183 = vmul.f32 %v1182, %v1181
          %v1184 = vmul.f32 %v1177, %v1073
          %v1185 = vadd.f32 %v1183, %v1184
          %s1186 = scalar_lea.vmem %s364, 24 [#allocation9]
          %1187 = vst [vmem:[%s1186] sm:$0xff] %v1185
          %1188 = vst [vmem:[#allocation3] sm:$0xff] %v1185
        $region56: #{tpu_custom_call.1} parent=39 // pred_fallthru
          _
        %p1189 = scmp.eq.s32.totalorder %s29, 1
        // Predicated region
        $region57: #{tpu_custom_call.1} parent=39 // pred_check
          %p1190 = pneg %p1189
        $region58: #{tpu_custom_call.1} parent=39 // pred_check_branch
          %1192 = sbr.rel (%p1190) target = $region60
        $region59: #{tpu_custom_call.1} parent=39 // pred_region
          %v1193 = vld [vmem:[#allocation3] sm:$0xff]
          %s1194 = smul.u32 3, 3
          %s1195 = smul.addr %s1194, 8
          %s1196 = scalar_lea.vmem [#allocation2], %s1195
          %v1197 = vld [vmem:[%s1196] sm:$0xff]
          %v1198 = vld [vmem:[%s1196 + $0x8] sm:$0xff]
          %v1199 = vld [vmem:[%s1196 + $0x10] sm:$0xff]
          %v1200 = vpack.c.bf16 %v1193, %v1193
          %v1233 = vunpack.c.l.b16 %v569
          %v1234 = vunpack.c.h.b16 %v569
          %v1235 = vunpack.c.l.b16 %v570
          %v1236 = vunpack.c.l.b16 %v571
          %v1237 = vunpack.c.h.b16 %v571
          %v1238 = vunpack.c.l.b16 %v572
          %v1239 = vunpack.c.l.b16 %v573
          %v1240 = vunpack.c.h.b16 %v573
          %v1241 = vunpack.c.l.b16 %v574
          %v1242 = vunpack.c.l.b16 %v575
          %v1243 = vunpack.c.h.b16 %v575
          %v1244 = vunpack.c.l.b16 %v576
          %v1245 = vunpack.c.l.b16 %v577
          %v1246 = vunpack.c.h.b16 %v577
          %v1247 = vunpack.c.l.b16 %v578
          %v1248 = vunpack.c.l.b16 %v579
          %v1249 = vunpack.c.h.b16 %v579
          %v1250 = vunpack.c.l.b16 %v580
          %v1251 = vunpack.c.l.b16 %v581
          %v1252 = vunpack.c.h.b16 %v581
          %v1253 = vunpack.c.l.b16 %v582
          %v1254 = vunpack.c.l.b16 %v583
          %v1255 = vunpack.c.h.b16 %v583
          %v1256 = vunpack.c.l.b16 %v584
          %v1257 = vunpack.c.l.b16 %v585
          %v1258 = vunpack.c.h.b16 %v585
          %v1259 = vunpack.c.l.b16 %v586
          %v1260 = vunpack.c.l.b16 %v587
          %v1261 = vunpack.c.h.b16 %v587
          %v1262 = vunpack.c.l.b16 %v588
          %v1263 = vunpack.c.l.b16 %v589
          %v1264 = vunpack.c.h.b16 %v589
          %v1265 = vunpack.c.l.b16 %v590
          %v1266 = vunpack.c.l.b16 %v591
          %v1267 = vunpack.c.h.b16 %v591
          %v1268 = vunpack.c.l.b16 %v592
          %v1269 = vunpack.c.l.b16 %v593
          %v1270 = vunpack.c.h.b16 %v593
          %v1271 = vunpack.c.l.b16 %v594
          %v1272 = vunpack.c.l.b16 %v595
          %v1273 = vunpack.c.h.b16 %v595
          %v1274 = vunpack.c.l.b16 %v596
          %v1275 = vunpack.c.l.b16 %v597
          %v1276 = vunpack.c.h.b16 %v597
          %v1277 = vunpack.c.l.b16 %v598
          %v1278 = vunpack.c.l.b16 %v599
          %v1279 = vunpack.c.h.b16 %v599
          %v1280 = vunpack.c.l.b16 %v600
          %v1281 = vpack.c.b16 %v1236, %v1233
          %v1282 = vpack.c.b16 %v1237, %v1234
          %v1283 = vpack.c.b16 %v1238, %v1235
          %v1284 = vpack.c.b16 %v1242, %v1239
          %v1285 = vpack.c.b16 %v1243, %v1240
          %v1286 = vpack.c.b16 %v1244, %v1241
          %v1287 = vpack.c.b16 %v1248, %v1245
          %v1288 = vpack.c.b16 %v1249, %v1246
          %v1289 = vpack.c.b16 %v1250, %v1247
          %v1290 = vpack.c.b16 %v1254, %v1251
          %v1291 = vpack.c.b16 %v1255, %v1252
          %v1292 = vpack.c.b16 %v1256, %v1253
          %v1293 = vpack.c.b16 %v1260, %v1257
          %v1294 = vpack.c.b16 %v1261, %v1258
          %v1295 = vpack.c.b16 %v1262, %v1259
          %v1296 = vpack.c.b16 %v1266, %v1263
          %v1297 = vpack.c.b16 %v1267, %v1264
          %v1298 = vpack.c.b16 %v1268, %v1265
          %v1299 = vpack.c.b16 %v1272, %v1269
          %v1300 = vpack.c.b16 %v1273, %v1270
          %v1301 = vpack.c.b16 %v1274, %v1271
          %v1302 = vpack.c.b16 %v1278, %v1275
          %v1303 = vpack.c.b16 %v1279, %v1276
          %v1304 = vpack.c.b16 %v1280, %v1277
          %1329 = vmatprep.subr.bf16.mxu0 %v1282
          %1330 = vmatpush1.bf16.msra.mxu0 %v1281
          %1331 = vmatprep.subr.bf16.mxu0 %v1285
          %1332 = vmatpush1.bf16.msra.mxu0 %v1284
          %1333 = vmatprep.subr.bf16.mxu0 %v1288
          %1334 = vmatpush1.bf16.msra.mxu0 %v1287
          %1335 = vmatprep.subr.bf16.mxu0 %v1291
          %1336 = vmatpush1.bf16.msra.mxu0 %v1290
          %1337 = vmatprep.subr.bf16.mxu0 %v1294
          %1338 = vmatpush1.bf16.msra.mxu0 %v1293
          %1339 = vmatprep.subr.bf16.mxu0 %v1297
          %1340 = vmatpush1.bf16.msra.mxu0 %v1296
          %1341 = vmatprep.subr.bf16.mxu0 %v1300
          %1342 = vmatpush1.bf16.msra.mxu0 %v1299
          %1343 = vmatprep.subr.bf16.mxu0 %v1303
          %1344 = vmatpush1.bf16.msra.mxu0 %v1302
          %1345 = vmatprep.subr.bf16.mxu0 0
          %1346 = vmatpush1.bf16.msra.mxu0 0
          %1347 = vmatprep.subr.bf16.mxu0 0
          %1348 = vmatpush1.bf16.msra.mxu0 0
          %1349 = vmatprep.subr.bf16.mxu0 0
          %1350 = vmatpush1.bf16.msra.mxu0 0
          %1351 = vmatprep.subr.bf16.mxu0 0
          %1352 = vmatpush1.bf16.msra.mxu0 0
          %1353 = vmatprep.subr.bf16.mxu0 0
          %1354 = vmatpush1.bf16.msra.mxu0 0
          %1355 = vmatprep.subr.bf16.mxu0 0
          %1356 = vmatpush1.bf16.msra.mxu0 0
          %1357 = vmatprep.subr.bf16.mxu0 0
          %1358 = vmatpush1.bf16.msra.mxu0 0
          %1359 = vmatprep.subr.bf16.mxu0 0
          %1360 = vmatpush1.bf16.msra.mxu0 0
          %1361 = vmatprep.mubr.bf16.mxu0 0
          %1362 = vmatmul.mubr.bf16.gmra.mrb[0].mxu0 %v1200
          %v1363 = vpop.f32.mrb[0].mxu0
          %v1364 = vadd.f32 0.0, %v1363
          %v1365 = vpop.f32.mrb[0].mxu0
          %v1366 = vadd.f32 0.0, %v1365
          %v1367 = vpop.f32.mrb[0].mxu0
          %v1368 = vpop.f32.mrb[0].mxu0
          %1369 = vdwg.mxu0
          %1370 = vmatprep.subr.bf16.mxu0 0
          %1371 = vmatpush1.bf16.msra.mxu0 %v1283
          %1372 = vmatprep.subr.bf16.mxu0 0
          %1373 = vmatpush1.bf16.msra.mxu0 %v1286
          %1374 = vmatprep.subr.bf16.mxu0 0
          %1375 = vmatpush1.bf16.msra.mxu0 %v1289
          %1376 = vmatprep.subr.bf16.mxu0 0
          %1377 = vmatpush1.bf16.msra.mxu0 %v1292
          %1378 = vmatprep.subr.bf16.mxu0 0
          %1379 = vmatpush1.bf16.msra.mxu0 %v1295
          %1380 = vmatprep.subr.bf16.mxu0 0
          %1381 = vmatpush1.bf16.msra.mxu0 %v1298
          %1382 = vmatprep.subr.bf16.mxu0 0
          %1383 = vmatpush1.bf16.msra.mxu0 %v1301
          %1384 = vmatprep.subr.bf16.mxu0 0
          %1385 = vmatpush1.bf16.msra.mxu0 %v1304
          %1386 = vmatprep.subr.bf16.mxu0 0
          %1387 = vmatpush1.bf16.msra.mxu0 0
          %1388 = vmatprep.subr.bf16.mxu0 0
          %1389 = vmatpush1.bf16.msra.mxu0 0
          %1390 = vmatprep.subr.bf16.mxu0 0
          %1391 = vmatpush1.bf16.msra.mxu0 0
          %1392 = vmatprep.subr.bf16.mxu0 0
          %1393 = vmatpush1.bf16.msra.mxu0 0
          %1394 = vmatprep.subr.bf16.mxu0 0
          %1395 = vmatpush1.bf16.msra.mxu0 0
          %1396 = vmatprep.subr.bf16.mxu0 0
          %1397 = vmatpush1.bf16.msra.mxu0 0
          %1398 = vmatprep.subr.bf16.mxu0 0
          %1399 = vmatpush1.bf16.msra.mxu0 0
          %1400 = vmatprep.subr.bf16.mxu0 0
          %1401 = vmatpush1.bf16.msra.mxu0 0
          %1402 = vmatprep.mubr.bf16.mxu0 0
          %1403 = vmatmul.mubr.bf16.gmra.mrb[0].mxu0 %v1200
          %v1404 = vpop.f32.mrb[0].mxu0
          %v1405 = vadd.f32 0.0, %v1404
          %v1406 = vpop.f32.mrb[0].mxu0
          %v1407 = vpop.f32.mrb[0].mxu0
          %v1408 = vpop.f32.mrb[0].mxu0
          %1409 = vdwg.mxu0
          %v1410 = vadd.f32 %v1197, %v1364
          %v1411 = vxor.u32 %v1410, 2147483648
          %v1412 = vmul.f32 %v1411, 1.442695
          %v1413 = vpow.pop %v1412
          %v1414 = vadd.f32 %v1413, 1.0
          %v1415 = vrcp.pop %v1414
          %v1416 = vmul.f32 1.0, %v1415
          %v1417 = vadd.f32 %v1198, %v1366
          %v1418 = vxor.u32 %v1417, 2147483648
          %v1419 = vmul.f32 %v1418, 1.442695
          %v1420 = vpow.pop %v1419
          %v1421 = vadd.f32 %v1420, 1.0
          %v1422 = vrcp.pop %v1421
          %v1423 = vmul.f32 1.0, %v1422
          %v1424 = vadd.f32 %v1405, %v606
          %v1425 = vmul.f32 %v1416, %v1424
          %v1426 = vadd.f32 %v1199, %v1425
          %v1427 = vtanh.pop %v1426
          %v1428 = vsub.f32 1.0, %v1423
          %v1429 = vmul.f32 %v1428, %v1427
          %v1430 = vmul.f32 %v1423, %v1193
          %v1431 = vadd.f32 %v1429, %v1430
          %s1432 = scalar_lea.vmem %s364, 24 [#allocation9]
          %1433 = vst [vmem:[%s1432] sm:$0xff] %v1431
          %s1434 = smul.u32 2, 3
          %s1435 = smul.addr %s1434, 8
          %s1436 = scalar_lea.vmem [#allocation2], %s1435
          %v1437 = vld [vmem:[%s1436] sm:$0xff]
          %v1438 = vld [vmem:[%s1436 + $0x8] sm:$0xff]
          %v1439 = vld [vmem:[%s1436 + $0x10] sm:$0xff]
          %v1440 = vpack.c.bf16 %v1431, %v1431
          %1441 = vmatprep.subr.bf16.mxu0 %v1282
          %1442 = vmatpush1.bf16.msra.mxu0 %v1281
          %1443 = vmatprep.subr.bf16.mxu0 %v1285
          %1444 = vmatpush1.bf16.msra.mxu0 %v1284
          %1445 = vmatprep.subr.bf16.mxu0 %v1288
          %1446 = vmatpush1.bf16.msra.mxu0 %v1287
          %1447 = vmatprep.subr.bf16.mxu0 %v1291
          %1448 = vmatpush1.bf16.msra.mxu0 %v1290
          %1449 = vmatprep.subr.bf16.mxu0 %v1294
          %1450 = vmatpush1.bf16.msra.mxu0 %v1293
          %1451 = vmatprep.subr.bf16.mxu0 %v1297
          %1452 = vmatpush1.bf16.msra.mxu0 %v1296
          %1453 = vmatprep.subr.bf16.mxu0 %v1300
          %1454 = vmatpush1.bf16.msra.mxu0 %v1299
          %1455 = vmatprep.subr.bf16.mxu0 %v1303
          %1456 = vmatpush1.bf16.msra.mxu0 %v1302
          %1457 = vmatprep.subr.bf16.mxu0 0
          %1458 = vmatpush1.bf16.msra.mxu0 0
          %1459 = vmatprep.subr.bf16.mxu0 0
          %1460 = vmatpush1.bf16.msra.mxu0 0
          %1461 = vmatprep.subr.bf16.mxu0 0
          %1462 = vmatpush1.bf16.msra.mxu0 0
          %1463 = vmatprep.subr.bf16.mxu0 0
          %1464 = vmatpush1.bf16.msra.mxu0 0
          %1465 = vmatprep.subr.bf16.mxu0 0
          %1466 = vmatpush1.bf16.msra.mxu0 0
          %1467 = vmatprep.subr.bf16.mxu0 0
          %1468 = vmatpush1.bf16.msra.mxu0 0
          %1469 = vmatprep.subr.bf16.mxu0 0
          %1470 = vmatpush1.bf16.msra.mxu0 0
          %1471 = vmatprep.subr.bf16.mxu0 0
          %1472 = vmatpush1.bf16.msra.mxu0 0
          %1473 = vmatprep.mubr.bf16.mxu0 0
          %1474 = vmatmul.mubr.bf16.gmra.mrb[0].mxu0 %v1440
          %v1475 = vpop.f32.mrb[0].mxu0
          %v1476 = vadd.f32 0.0, %v1475
          %v1477 = vpop.f32.mrb[0].mxu0
          %v1478 = vadd.f32 0.0, %v1477
          %v1479 = vpop.f32.mrb[0].mxu0
          %v1480 = vpop.f32.mrb[0].mxu0
          %1481 = vdwg.mxu0
          %1482 = vmatprep.subr.bf16.mxu0 0
          %1483 = vmatpush1.bf16.msra.mxu0 %v1283
          %1484 = vmatprep.subr.bf16.mxu0 0
          %1485 = vmatpush1.bf16.msra.mxu0 %v1286
          %1486 = vmatprep.subr.bf16.mxu0 0
          %1487 = vmatpush1.bf16.msra.mxu0 %v1289
          %1488 = vmatprep.subr.bf16.mxu0 0
          %1489 = vmatpush1.bf16.msra.mxu0 %v1292
          %1490 = vmatprep.subr.bf16.mxu0 0
          %1491 = vmatpush1.bf16.msra.mxu0 %v1295
          %1492 = vmatprep.subr.bf16.mxu0 0
          %1493 = vmatpush1.bf16.msra.mxu0 %v1298
          %1494 = vmatprep.subr.bf16.mxu0 0
          %1495 = vmatpush1.bf16.msra.mxu0 %v1301
          %1496 = vmatprep.subr.bf16.mxu0 0
          %1497 = vmatpush1.bf16.msra.mxu0 %v1304
          %1498 = vmatprep.subr.bf16.mxu0 0
          %1499 = vmatpush1.bf16.msra.mxu0 0
          %1500 = vmatprep.subr.bf16.mxu0 0
          %1501 = vmatpush1.bf16.msra.mxu0 0
          %1502 = vmatprep.subr.bf16.mxu0 0
          %1503 = vmatpush1.bf16.msra.mxu0 0
          %1504 = vmatprep.subr.bf16.mxu0 0
          %1505 = vmatpush1.bf16.msra.mxu0 0
          %1506 = vmatprep.subr.bf16.mxu0 0
          %1507 = vmatpush1.bf16.msra.mxu0 0
          %1508 = vmatprep.subr.bf16.mxu0 0
          %1509 = vmatpush1.bf16.msra.mxu0 0
          %1510 = vmatprep.subr.bf16.mxu0 0
          %1511 = vmatpush1.bf16.msra.mxu0 0
          %1512 = vmatprep.subr.bf16.mxu0 0
          %1513 = vmatpush1.bf16.msra.mxu0 0
          %1514 = vmatprep.mubr.bf16.mxu0 0
          %1515 = vmatmul.mubr.bf16.gmra.mrb[0].mxu0 %v1440
          %v1516 = vpop.f32.mrb[0].mxu0
          %v1517 = vadd.f32 0.0, %v1516
          %v1518 = vpop.f32.mrb[0].mxu0
          %v1519 = vpop.f32.mrb[0].mxu0
          %v1520 = vpop.f32.mrb[0].mxu0
          %1521 = vdwg.mxu0
          %v1522 = vadd.f32 %v1437, %v1476
          %v1523 = vxor.u32 %v1522, 2147483648
          %v1524 = vmul.f32 %v1523, 1.442695
          %v1525 = vpow.pop %v1524
          %v1526 = vadd.f32 %v1525, 1.0
          %v1527 = vrcp.pop %v1526
          %v1528 = vmul.f32 1.0, %v1527
          %v1529 = vadd.f32 %v1438, %v1478
          %v1530 = vxor.u32 %v1529, 2147483648
          %v1531 = vmul.f32 %v1530, 1.442695
          %v1532 = vpow.pop %v1531
          %v1533 = vadd.f32 %v1532, 1.0
          %v1534 = vrcp.pop %v1533
          %v1535 = vmul.f32 1.0, %v1534
          %v1536 = vadd.f32 %v1517, %v606
          %v1537 = vmul.f32 %v1528, %v1536
          %v1538 = vadd.f32 %v1439, %v1537
          %v1539 = vtanh.pop %v1538
          %v1540 = vsub.f32 1.0, %v1535
          %v1541 = vmul.f32 %v1540, %v1539
          %v1542 = vmul.f32 %v1535, %v1431
          %v1543 = vadd.f32 %v1541, %v1542
          %s1544 = scalar_lea.vmem %s364, 16 [#allocation9]
          %1545 = vst [vmem:[%s1544] sm:$0xff] %v1543
          %s1546 = smul.u32 1, 3
          %s1547 = smul.addr %s1546, 8
          %s1548 = scalar_lea.vmem [#allocation2], %s1547
          %v1549 = vld [vmem:[%s1548] sm:$0xff]
          %v1550 = vld [vmem:[%s1548 + $0x8] sm:$0xff]
          %v1551 = vld [vmem:[%s1548 + $0x10] sm:$0xff]
          %v1552 = vpack.c.bf16 %v1543, %v1543
          %1553 = vmatprep.subr.bf16.mxu0 %v1282
          %1554 = vmatpush1.bf16.msra.mxu0 %v1281
          %1555 = vmatprep.subr.bf16.mxu0 %v1285
          %1556 = vmatpush1.bf16.msra.mxu0 %v1284
          %1557 = vmatprep.subr.bf16.mxu0 %v1288
          %1558 = vmatpush1.bf16.msra.mxu0 %v1287
          %1559 = vmatprep.subr.bf16.mxu0 %v1291
          %1560 = vmatpush1.bf16.msra.mxu0 %v1290
          %1561 = vmatprep.subr.bf16.mxu0 %v1294
          %1562 = vmatpush1.bf16.msra.mxu0 %v1293
          %1563 = vmatprep.subr.bf16.mxu0 %v1297
          %1564 = vmatpush1.bf16.msra.mxu0 %v1296
          %1565 = vmatprep.subr.bf16.mxu0 %v1300
          %1566 = vmatpush1.bf16.msra.mxu0 %v1299
          %1567 = vmatprep.subr.bf16.mxu0 %v1303
          %1568 = vmatpush1.bf16.msra.mxu0 %v1302
          %1569 = vmatprep.subr.bf16.mxu0 0
          %1570 = vmatpush1.bf16.msra.mxu0 0
          %1571 = vmatprep.subr.bf16.mxu0 0
          %1572 = vmatpush1.bf16.msra.mxu0 0
          %1573 = vmatprep.subr.bf16.mxu0 0
          %1574 = vmatpush1.bf16.msra.mxu0 0
          %1575 = vmatprep.subr.bf16.mxu0 0
          %1576 = vmatpush1.bf16.msra.mxu0 0
          %1577 = vmatprep.subr.bf16.mxu0 0
          %1578 = vmatpush1.bf16.msra.mxu0 0
          %1579 = vmatprep.subr.bf16.mxu0 0
          %1580 = vmatpush1.bf16.msra.mxu0 0
          %1581 = vmatprep.subr.bf16.mxu0 0
          %1582 = vmatpush1.bf16.msra.mxu0 0
          %1583 = vmatprep.subr.bf16.mxu0 0
          %1584 = vmatpush1.bf16.msra.mxu0 0
          %1585 = vmatprep.mubr.bf16.mxu0 0
          %1586 = vmatmul.mubr.bf16.gmra.mrb[0].mxu0 %v1552
          %v1587 = vpop.f32.mrb[0].mxu0
          %v1588 = vadd.f32 0.0, %v1587
          %v1589 = vpop.f32.mrb[0].mxu0
          %v1590 = vadd.f32 0.0, %v1589
          %v1591 = vpop.f32.mrb[0].mxu0
          %v1592 = vpop.f32.mrb[0].mxu0
          %1593 = vdwg.mxu0
          %1594 = vmatprep.subr.bf16.mxu0 0
          %1595 = vmatpush1.bf16.msra.mxu0 %v1283
          %1596 = vmatprep.subr.bf16.mxu0 0
          %1597 = vmatpush1.bf16.msra.mxu0 %v1286
          %1598 = vmatprep.subr.bf16.mxu0 0
          %1599 = vmatpush1.bf16.msra.mxu0 %v1289
          %1600 = vmatprep.subr.bf16.mxu0 0
          %1601 = vmatpush1.bf16.msra.mxu0 %v1292
          %1602 = vmatprep.subr.bf16.mxu0 0
          %1603 = vmatpush1.bf16.msra.mxu0 %v1295
          %1604 = vmatprep.subr.bf16.mxu0 0
          %1605 = vmatpush1.bf16.msra.mxu0 %v1298
          %1606 = vmatprep.subr.bf16.mxu0 0
          %1607 = vmatpush1.bf16.msra.mxu0 %v1301
          %1608 = vmatprep.subr.bf16.mxu0 0
          %1609 = vmatpush1.bf16.msra.mxu0 %v1304
          %1610 = vmatprep.subr.bf16.mxu0 0
          %1611 = vmatpush1.bf16.msra.mxu0 0
          %1612 = vmatprep.subr.bf16.mxu0 0
          %1613 = vmatpush1.bf16.msra.mxu0 0
          %1614 = vmatprep.subr.bf16.mxu0 0
          %1615 = vmatpush1.bf16.msra.mxu0 0
          %1616 = vmatprep.subr.bf16.mxu0 0
          %1617 = vmatpush1.bf16.msra.mxu0 0
          %1618 = vmatprep.subr.bf16.mxu0 0
          %1619 = vmatpush1.bf16.msra.mxu0 0
          %1620 = vmatprep.subr.bf16.mxu0 0
          %1621 = vmatpush1.bf16.msra.mxu0 0
          %1622 = vmatprep.subr.bf16.mxu0 0
          %1623 = vmatpush1.bf16.msra.mxu0 0
          %1624 = vmatprep.subr.bf16.mxu0 0
          %1625 = vmatpush1.bf16.msra.mxu0 0
          %1626 = vmatprep.mubr.bf16.mxu0 0
          %1627 = vmatmul.mubr.bf16.gmra.mrb[0].mxu0 %v1552
          %v1628 = vpop.f32.mrb[0].mxu0
          %v1629 = vadd.f32 0.0, %v1628
          %v1630 = vpop.f32.mrb[0].mxu0
          %v1631 = vpop.f32.mrb[0].mxu0
          %v1632 = vpop.f32.mrb[0].mxu0
          %1633 = vdwg.mxu0
          %v1634 = vadd.f32 %v1549, %v1588
          %v1635 = vxor.u32 %v1634, 2147483648
          %v1636 = vmul.f32 %v1635, 1.442695
          %v1637 = vpow.pop %v1636
          %v1638 = vadd.f32 %v1637, 1.0
          %v1639 = vrcp.pop %v1638
          %v1640 = vmul.f32 1.0, %v1639
          %v1641 = vadd.f32 %v1550, %v1590
          %v1642 = vxor.u32 %v1641, 2147483648
          %v1643 = vmul.f32 %v1642, 1.442695
          %v1644 = vpow.pop %v1643
          %v1645 = vadd.f32 %v1644, 1.0
          %v1646 = vrcp.pop %v1645
          %v1647 = vmul.f32 1.0, %v1646
          %v1648 = vadd.f32 %v1629, %v606
          %v1649 = vmul.f32 %v1640, %v1648
          %v1650 = vadd.f32 %v1551, %v1649
          %v1651 = vtanh.pop %v1650
          %v1652 = vsub.f32 1.0, %v1647
          %v1653 = vmul.f32 %v1652, %v1651
          %v1654 = vmul.f32 %v1647, %v1543
          %v1655 = vadd.f32 %v1653, %v1654
          %s1656 = scalar_lea.vmem %s364, 8 [#allocation9]
          %1657 = vst [vmem:[%s1656] sm:$0xff] %v1655
          %s1658 = smul.u32 0, 3
          %s1659 = smul.addr %s1658, 8
          %s1660 = scalar_lea.vmem [#allocation2], %s1659
          %v1661 = vld [vmem:[%s1660] sm:$0xff]
          %v1662 = vld [vmem:[%s1660 + $0x8] sm:$0xff]
          %v1663 = vld [vmem:[%s1660 + $0x10] sm:$0xff]
          %v1664 = vpack.c.bf16 %v1655, %v1655
          %1665 = vmatprep.subr.bf16.mxu0 %v1282
          %1666 = vmatpush1.bf16.msra.mxu0 %v1281
          %1667 = vmatprep.subr.bf16.mxu0 %v1285
          %1668 = vmatpush1.bf16.msra.mxu0 %v1284
          %1669 = vmatprep.subr.bf16.mxu0 %v1288
          %1670 = vmatpush1.bf16.msra.mxu0 %v1287
          %1671 = vmatprep.subr.bf16.mxu0 %v1291
          %1672 = vmatpush1.bf16.msra.mxu0 %v1290
          %1673 = vmatprep.subr.bf16.mxu0 %v1294
          %1674 = vmatpush1.bf16.msra.mxu0 %v1293
          %1675 = vmatprep.subr.bf16.mxu0 %v1297
          %1676 = vmatpush1.bf16.msra.mxu0 %v1296
          %1677 = vmatprep.subr.bf16.mxu0 %v1300
          %1678 = vmatpush1.bf16.msra.mxu0 %v1299
          %1679 = vmatprep.subr.bf16.mxu0 %v1303
          %1680 = vmatpush1.bf16.msra.mxu0 %v1302
          %1681 = vmatprep.subr.bf16.mxu0 0
          %1682 = vmatpush1.bf16.msra.mxu0 0
          %1683 = vmatprep.subr.bf16.mxu0 0
          %1684 = vmatpush1.bf16.msra.mxu0 0
          %1685 = vmatprep.subr.bf16.mxu0 0
          %1686 = vmatpush1.bf16.msra.mxu0 0
          %1687 = vmatprep.subr.bf16.mxu0 0
          %1688 = vmatpush1.bf16.msra.mxu0 0
          %1689 = vmatprep.subr.bf16.mxu0 0
          %1690 = vmatpush1.bf16.msra.mxu0 0
          %1691 = vmatprep.subr.bf16.mxu0 0
          %1692 = vmatpush1.bf16.msra.mxu0 0
          %1693 = vmatprep.subr.bf16.mxu0 0
          %1694 = vmatpush1.bf16.msra.mxu0 0
          %1695 = vmatprep.subr.bf16.mxu0 0
          %1696 = vmatpush1.bf16.msra.mxu0 0
          %1697 = vmatprep.mubr.bf16.mxu0 0
          %1698 = vmatmul.mubr.bf16.gmra.mrb[0].mxu0 %v1664
          %v1699 = vpop.f32.mrb[0].mxu0
          %v1700 = vadd.f32 0.0, %v1699
          %v1701 = vpop.f32.mrb[0].mxu0
          %v1702 = vadd.f32 0.0, %v1701
          %v1703 = vpop.f32.mrb[0].mxu0
          %v1704 = vpop.f32.mrb[0].mxu0
          %1705 = vdwg.mxu0
          %1706 = vmatprep.subr.bf16.mxu0 0
          %1707 = vmatpush1.bf16.msra.mxu0 %v1283
          %1708 = vmatprep.subr.bf16.mxu0 0
          %1709 = vmatpush1.bf16.msra.mxu0 %v1286
          %1710 = vmatprep.subr.bf16.mxu0 0
          %1711 = vmatpush1.bf16.msra.mxu0 %v1289
          %1712 = vmatprep.subr.bf16.mxu0 0
          %1713 = vmatpush1.bf16.msra.mxu0 %v1292
          %1714 = vmatprep.subr.bf16.mxu0 0
          %1715 = vmatpush1.bf16.msra.mxu0 %v1295
          %1716 = vmatprep.subr.bf16.mxu0 0
          %1717 = vmatpush1.bf16.msra.mxu0 %v1298
          %1718 = vmatprep.subr.bf16.mxu0 0
          %1719 = vmatpush1.bf16.msra.mxu0 %v1301
          %1720 = vmatprep.subr.bf16.mxu0 0
          %1721 = vmatpush1.bf16.msra.mxu0 %v1304
          %1722 = vmatprep.subr.bf16.mxu0 0
          %1723 = vmatpush1.bf16.msra.mxu0 0
          %1724 = vmatprep.subr.bf16.mxu0 0
          %1725 = vmatpush1.bf16.msra.mxu0 0
          %1726 = vmatprep.subr.bf16.mxu0 0
          %1727 = vmatpush1.bf16.msra.mxu0 0
          %1728 = vmatprep.subr.bf16.mxu0 0
          %1729 = vmatpush1.bf16.msra.mxu0 0
          %1730 = vmatprep.subr.bf16.mxu0 0
          %1731 = vmatpush1.bf16.msra.mxu0 0
          %1732 = vmatprep.subr.bf16.mxu0 0
          %1733 = vmatpush1.bf16.msra.mxu0 0
          %1734 = vmatprep.subr.bf16.mxu0 0
          %1735 = vmatpush1.bf16.msra.mxu0 0
          %1736 = vmatprep.subr.bf16.mxu0 0
          %1737 = vmatpush1.bf16.msra.mxu0 0
          %1738 = vmatprep.mubr.bf16.mxu0 0
          %1739 = vmatmul.mubr.bf16.gmra.mrb[0].mxu0 %v1664
          %v1740 = vpop.f32.mrb[0].mxu0
          %v1741 = vadd.f32 0.0, %v1740
          %v1742 = vpop.f32.mrb[0].mxu0
          %v1743 = vpop.f32.mrb[0].mxu0
          %v1744 = vpop.f32.mrb[0].mxu0
          %1745 = vdwg.mxu0
          %v1746 = vadd.f32 %v1661, %v1700
          %v1747 = vxor.u32 %v1746, 2147483648
          %v1748 = vmul.f32 %v1747, 1.442695
          %v1749 = vpow.pop %v1748
          %v1750 = vadd.f32 %v1749, 1.0
          %v1751 = vrcp.pop %v1750
          %v1752 = vmul.f32 1.0, %v1751
          %v1753 = vadd.f32 %v1662, %v1702
          %v1754 = vxor.u32 %v1753, 2147483648
          %v1755 = vmul.f32 %v1754, 1.442695
          %v1756 = vpow.pop %v1755
          %v1757 = vadd.f32 %v1756, 1.0
          %v1758 = vrcp.pop %v1757
          %v1759 = vmul.f32 1.0, %v1758
          %v1760 = vadd.f32 %v1741, %v606
          %v1761 = vmul.f32 %v1752, %v1760
          %v1762 = vadd.f32 %v1663, %v1761
          %v1763 = vtanh.pop %v1762
          %v1764 = vsub.f32 1.0, %v1759
          %v1765 = vmul.f32 %v1764, %v1763
          %v1766 = vmul.f32 %v1759, %v1655
          %v1767 = vadd.f32 %v1765, %v1766
          %1768 = vst [vmem:[%s364] sm:$0xff] %v1767
          %1769 = vst [vmem:[#allocation3] sm:$0xff] %v1767
        $region60: #{tpu_custom_call.1} parent=39 // pred_fallthru
          _
        %s1770 = sand.u32 %s193, 1
        %s1771 = scalar_lea.sflag [#allocation6], %s1770
        %s1772 = sand.u32 %s193, 1
        %s1773 = smul.addr %s1772, 32
        %s1774 = scalar_lea.vmem [#allocation9], %s1773
        // Predicated region
        $region61: #{tpu_custom_call.1} parent=39 // pred_check
          %p1775 = pneg %p203
        $region62: #{tpu_custom_call.1} parent=39 // pred_check_branch
          %1777 = sbr.rel (%p1775) target = $region64
        $region63: #{tpu_custom_call.1} parent=39 // pred_region
          %s1778 = smul.u32 %s30, 2
          %s1779 = ssub.s32 1, %s1778
          %s1780 = smul.u32 %s29, %s1779
          %s1781 = sadd.s32 %s30, %s1780
          %s1782 = smul.u32 4, %s1781
          %s1784 = ssub.s32 512, 512
          %1785 = vsyncadd %s1771, %s1784
          %s1786 = smul.addr %s1782, 2
          %s1787 = sadd.s32 %s29, %s1786
          %s1788 = smul.addr %s1787, 128
          %s1789 = scalar_lea.hbm %s5, %s1788
          %s1790 = sshll.u32 %s1774, 4
          %s1791 = int_to_ptr.vmem [resolvable:$true] %s1790
          %1796 = dma.vmem_to_hbm [thread:$0]  %s1791, 512, %s1789, %s1771, 128, 256, 8
        $region64: #{tpu_custom_call.1} parent=39 // pred_fallthru
          _
      $region40: #{tpu_custom_call.1} parent=5 // pred_fallthru
        _
      %p1797 = scmp.le.s32.totalorder 2, %s20
      // Predicated region
      $region65: #{tpu_custom_call.1} parent=5 // pred_check
        %p1798 = pneg %p1797
      $region66: #{tpu_custom_call.1} parent=5 // pred_check_branch
        %1800 = sbr.rel (%p1798) target = $region68
      $region67: #{tpu_custom_call.1} parent=5 // pred_region
        %s1801 = ssub.s32 %s20, 2
        // Predicated region
        $region69: #{tpu_custom_call.1} parent=67 // pred_check
          %p1802 = pneg %p209
        $region70: #{tpu_custom_call.1} parent=67 // pred_check_branch
          %1804 = sbr.rel (%p1802) target = $region72
        $region71: #{tpu_custom_call.1} parent=67 // pred_region
          %s1805 = sand.u32 %s194, 1
          %s1806 = scalar_lea.sflag [#allocation6], %s1805
          %s1807 = sand.u32 %s194, 1
          %s1808 = smul.addr %s1807, 32
          %s1809 = scalar_lea.vmem [#allocation9], %s1808
          %1810 = dma.done %s1806, 512
        $region72: #{tpu_custom_call.1} parent=67 // pred_fallthru
          _
      $region68: #{tpu_custom_call.1} parent=5 // pred_fallthru
        _
    $region6: #{tpu_custom_call.1} parent=1 // loop_footer
      %s24 = sadd.s32 1, %s20
    $region7: #{tpu_custom_call.1} parent=1 // loop_footer_branch
      %19 = sbr.rel target = $region3
    $region8: #{tpu_custom_call.1} parent=1 // loop_exit
      _
    %1811 = vsyncpa [#allocation5], 1
    %s1812 = scalar_lea.sflag [#allocation5], 1
    %1813 = vsyncpa %s1812, 1
    %1814 = vsyncpa [#allocation8], 1
    %s1815 = scalar_lea.sflag [#allocation8], 1
    %1816 = vsyncpa %s1815, 1
    %1817 = vsyncpa [#allocation6], 1
    %s1818 = scalar_lea.sflag [#allocation6], 1
    %1819 = vsyncpa %s1818, 1

</llo_original>
